<compile_context>
chip_gen: v7x
topology: tpu7x:2x2x1
jax: 0.10.0
libtpu: 0.0.40
codegen_flags: <defaults>
</compile_context>

<pallas_src>
import functools

import jax
import jax.numpy as jnp
import numpy as np
from jax.experimental import pallas as pl
from jax.experimental.pallas import tpu as pltpu

# Module hyper-parameters (defaults of the PyTorch module).
DIM = 78
HEADS = 6
DIM_HEAD = 13
INNER = HEADS * DIM_HEAD          # 78
LA = 1.0
LG = 0.5
SCALE = DIM_HEAD ** (-0.5)
LN_EPS = 1e-5                     # nn.LayerNorm default

LANE = 128                        # padded feature / lane width
NEG_BIG = -1e30                   # finite mask fill


def _round_up(x, m):
    return (x + m - 1) // m * m


def _vmem_estimate_bytes(block_b, n_pad, has_adj):
    """Rough per-step VMEM footprint (f32, lane-padded) for the flattened path."""
    rows = block_b * n_pad
    rows_l = max(_round_up(rows, LANE), LANE)   # lane width of (rows, rows) temps
    sq = rows * rows_l * 4
    est = 2 * 2 * rows * LANE * 4               # x + out blocks, double-buffered
    est += 4 * rows * 256 * 4                   # fused qkv (f32 + mxu copy), 234->256
    est += 5 * sq                               # mask bias + live (rows, rows) temps
    est += 4 * rows * LANE * 4                  # out_acc / vproj_sum / v'_h / misc
    if has_adj:
        est += 2 * block_b * n_pad * max(n_pad, LANE) * 4   # adjacency block, dbl-buf
        est += 2 * rows * LANE * 4
    return est


def _choose_block_b(B, n_pad, has_adj, target_rows=512, vmem_budget=40 << 20):
    """Largest batch block with grid >= 2 steps, rows <= target_rows and a VMEM
    estimate inside the budget.  Prefers an even grid length (v7x: 2 TCs)."""
    cands = []
    for c in range(1, max(B // 2, 1) + 1):
        if B % c:
            continue
        if c > 1 and c * n_pad > target_rows:
            continue
        if c > 1 and _vmem_estimate_bytes(c, n_pad, has_adj) > vmem_budget:
            continue
        cands.append(c)
    if not cands:
        return 1
    best = max(cands)
    even = [c for c in cands if (B // c) % 2 == 0]
    if even and max(even) * 2 >= best:
        return max(even)
    return best


def _prenorm_attn_kernel(x_ref, wqkv_ref, wo_heads_ref, bo_ref, g_ref, b_ref,
                         mcol_ref, mrow_ref, *rest,
                         block_b, n_pad, has_adj, mxu_dtype, approx_recip):
    """One grid step = `block_b` whole batches, flattened to rows = block_b*n_pad:
    LayerNorm -> fused QKV -> per-head flattened attention (W_out folded into V)
    -> single adjacency matmul -> one lane-dense store."""
    if has_adj:
        adj_ref, o_ref = rest
    else:
        (o_ref,) = rest

    f32 = jnp.float32
    dp = x_ref.shape[-1]                        # 128 (padded feature dim)
    rows = x_ref.shape[0]                       # block_b * n_pad

    # ---- LayerNorm over the DIM valid lanes (pad lanes of x are zero) -------
    x = x_ref[...]
    lane = jax.lax.broadcasted_iota(jnp.int32, (1, dp), 1)
    valid_lane = (lane < DIM).astype(f32)
    mean = jnp.sum(x, axis=-1, keepdims=True) * (1.0 / DIM)
    cent = (x - mean) * valid_lane
    var = jnp.sum(cent * cent, axis=-1, keepdims=True) * (1.0 / DIM)
    # gamma/beta are zero-padded -> pad lanes of xn stay exactly zero.
    xn = cent * jax.lax.rsqrt(var + LN_EPS) * g_ref[...] + b_ref[...]

    # ---- fused QKV: ONE (rows, 128) @ (128, 234) matmul; SCALE folded into Wq.
    # Cast to the MXU dtype ONCE (review: no per-slice casts in the head loop).
    qkv = jnp.dot(xn.astype(mxu_dtype), wqkv_ref[...],
                  preferred_element_type=f32).astype(mxu_dtype)

    # ---- additive mask bias, built ONCE per step -----------------------------
    # mcol/mrow values are (batch_index + 1) if the token is valid else 0, so a
    # single compare gives "both valid AND same batch" (block-diagonal mask).
    mcol = mcol_ref[...]                        # (rows, 1) f32
    mrow = mrow_ref[...]                        # (1, rows) f32
    ok = (mcol == mrow) & (mcol > 0.5)
    neg_bias = jnp.where(ok, jnp.float32(0.0), jnp.float32(NEG_BIG))
    valid01 = (mcol > 0.5).astype(f32)          # plain 0/1 token validity

    out_acc = jnp.zeros((rows, dp), f32)
    vproj_sum = jnp.zeros((rows, dp), f32) if has_adj else None

    # ---- per-head attention, heads unrolled; batch flattened into M/N -------
    for hi in range(HEADS):
        qo = hi * DIM_HEAD
        ko = INNER + hi * DIM_HEAD
        vo = 2 * INNER + hi * DIM_HEAD
        q = qkv[:, qo:qo + DIM_HEAD]            # (rows, 13)
        k = qkv[:, ko:ko + DIM_HEAD]
        v = qkv[:, vo:vo + DIM_HEAD]

        # q @ k^T, contracting the last dims directly (no explicit transpose)
        dots = jax.lax.dot_general(q, k, (((1,), (1,)), ((), ())),
                                   preferred_element_type=f32)      # (rows, rows)
        dots = dots + neg_bias                  # 1 add per head (vs cmp+select)

        mx = jnp.max(dots, axis=-1, keepdims=True)
        e = jnp.exp(dots - mx)
        inv = pl.reciprocal(jnp.sum(e, axis=-1, keepdims=True), approx=approx_recip)
        attn = e * inv
        if LA != 1.0:                           # skip the multiply when la == 1
            attn = attn * LA

        # W_out folded into V: v'_h = v_h @ W_out[h]  (13 -> 128 lanes, free on MXU)
        w_h = wo_heads_ref[hi]                  # (13, 128)
        v_h = jnp.dot(v, w_h, preferred_element_type=f32)           # (rows, 128)
        out_acc = out_acc + jnp.dot(attn.astype(mxu_dtype), v_h.astype(mxu_dtype),
                                    preferred_element_type=f32)
        if has_adj:
            vproj_sum = vproj_sum + v_h

    # ---- adjacency term: lg * m_i * (A @ (m_j * sum_h v'_h)), ONE batched matmul
    if has_adj:
        vm = (vproj_sum * valid01).astype(mxu_dtype).reshape(block_b, n_pad, dp)
        adj_c = jnp.einsum('bij,bjd->bid', adj_ref[...].astype(mxu_dtype), vm,
                           preferred_element_type=f32).reshape(rows, dp)
        out_acc = out_acc + (LG * valid01) * adj_c

    # ---- single lane-dense (rows, 128) store + bias --------------------------
    o_ref[...] = out_acc + bo_ref[...]


def prenorm_attention_pallas(x, ln_gamma, ln_beta, w_qkv, w_out, b_out,
                             mask=None, adjacency_mat=None, distance_mat=None,
                             mxu_dtype=jnp.float32, block_b=None,
                             approx_recip=True, target_rows=512):
    """PreNorm(LayerNorm(78), Attention) forward.

    x: (B, N, 78) f32; ln_gamma/ln_beta: (78,); w_qkv: (78, 234); w_out: (78, 78);
    b_out: (78,); mask: (B, N) bool; adjacency_mat: (B, N, N) f32 or None.
    mxu_dtype=jnp.bfloat16 uses bf16 MXU operands with f32 accumulation (valid on
    v5e/v6e/v7x; only MXU operands are cast, softmax/LN math stays f32).
    approx_recip=True uses the EUP approximate reciprocal for the softmax denom.
    """
    del distance_mat  # dead code in the original forward
    B, N, D = x.shape
    assert D == DIM, f"expected feature dim {DIM}, got {D}"
    h, d = HEADS, DIM_HEAD
    f32 = jnp.float32

    n_pad = _round_up(max(N, 8), 8)       # token dim padded to a sublane multiple
    dp = LANE                             # feature dim padded to a full lane group
    has_adj = adjacency_mat is not None

    # ---- batch blocking sized against rows target + VMEM budget --------------
    if block_b is None:
        block_b = _choose_block_b(B, n_pad, has_adj, target_rows=target_rows)
    assert B % block_b == 0, "block_b must divide the batch size"
    grid_len = B // block_b
    rows = block_b * n_pad

    # ---- parameter / input plumbing (all padding done on the host side) ------
    # TODO(synk): keep the padded (n_pad, 128)-lane layout end-to-end in the
    # surrounding model to remove this extra HBM pass and the final slice.
    xp = jnp.zeros((B, n_pad, dp), f32).at[:, :N, :D].set(x.astype(f32))
    xp = xp.reshape(B * n_pad, dp)                              # lane-dense rows

    g = jnp.zeros((1, dp), f32).at[0, :D].set(ln_gamma.astype(f32))
    bta = jnp.zeros((1, dp), f32).at[0, :D].set(ln_beta.astype(f32))

    # fused qkv weight: columns reordered (h, qkv, d) -> (qkv, h, d), SCALE folded
    # into the q columns, rows zero-padded to 128.
    w4 = w_qkv.astype(f32).reshape(D, h, 3, d)
    w_fused = jnp.transpose(w4, (0, 2, 1, 3)).reshape(D, 3 * h * d)   # (78, 234)
    col_scale = jnp.concatenate([jnp.full((h * d,), SCALE, f32),
                                 jnp.ones((2 * h * d,), f32)])
    w_fused = w_fused * col_scale[None, :]
    wqkv_p = jnp.zeros((dp, 3 * h * d), f32).at[:D, :].set(w_fused).astype(mxu_dtype)

    # W_out split per head (HEADS, 13, 128): the output projection is fused into
    # the attn @ V matmul, so no lane concat and no separate projection matmul.
    wo_heads = jnp.zeros((h, d, dp), f32).at[:, :, :D].set(
        w_out.astype(f32).reshape(h, d, D)).astype(mxu_dtype)
    bo_p = jnp.zeros((1, dp), f32).at[0, :D].set(b_out.astype(f32))

    # mask encoded as (batch_index + 1) * valid: one array doubles as the token
    # validity mask and the block-diagonal same-batch test for flattened attention.
    if mask is None:
        valid = jnp.zeros((B, n_pad), f32).at[:, :N].set(1.0)
    else:
        valid = jnp.zeros((B, n_pad), f32).at[:, :N].set(mask.astype(f32))
    enc = valid * (jnp.arange(B, dtype=f32) + 1.0)[:, None]
    mcol = enc.reshape(B * n_pad, 1)                       # column (query) form
    mrow = enc.reshape(grid_len, 1, rows)                  # row (key) form

    inputs = [xp, wqkv_p, wo_heads, bo_p, g, bta, mcol, mrow]
    in_specs = [
        pl.BlockSpec((rows, dp), lambda i: (i, 0)),            # x (flattened rows)
        pl.BlockSpec((dp, 3 * h * d), lambda i: (0, 0)),       # fused W_qkv
        pl.BlockSpec((h, d, dp), lambda i: (0, 0, 0)),         # per-head W_out
        pl.BlockSpec((1, dp), lambda i: (0, 0)),               # b_out
        pl.BlockSpec((1, dp), lambda i: (0, 0)),               # LN gamma
        pl.BlockSpec((1, dp), lambda i: (0, 0)),               # LN beta
        pl.BlockSpec((rows, 1), lambda i: (i, 0)),             # mask (col form)
        pl.BlockSpec((None, 1, rows), lambda i: (i, 0, 0)),    # mask (row form)
    ]
    if has_adj:
        adjp = jnp.zeros((B, n_pad, n_pad), f32).at[:, :N, :N].set(
            adjacency_mat.astype(f32))
        inputs.append(adjp)
        in_specs.append(pl.BlockSpec((block_b, n_pad, n_pad), lambda i: (i, 0, 0)))
    # else: no adjacency input at all -> no (B, N, N) zeros materialized or DMA'd

    kernel = functools.partial(_prenorm_attn_kernel, block_b=block_b, n_pad=n_pad,
                               has_adj=has_adj, mxu_dtype=mxu_dtype,
                               approx_recip=approx_recip)

    out = pl.pallas_call(
        kernel,
        out_shape=jax.ShapeDtypeStruct((B * n_pad, dp), f32),
        grid_spec=pltpu.PrefetchScalarGridSpec(
            num_scalar_prefetch=0,
            grid=(grid_len,),
            in_specs=in_specs,
            out_specs=pl.BlockSpec((rows, dp), lambda i: (i, 0)),
        ),
        compiler_params=pltpu.CompilerParams(
            dimension_semantics=("parallel",),
            # 48 MiB: above the 16/32 MiB scoped defaults, below v7x's 64 MiB
            # physical VMEM; the block picker budgets 40 MiB against this.
            vmem_limit_bytes=48 * 1024 * 1024),
    )(*inputs)

    return out.reshape(B, n_pad, dp)[:, :N, :D]


def prenorm_attention_ref(x, ln_gamma, ln_beta, w_qkv, w_out, b_out,
                          mask=None, adjacency_mat=None):
    """Pure-JAX reference mirroring PreNorm(LayerNorm) + Attention forward."""
    B, N, D = x.shape
    h, d = HEADS, DIM_HEAD
    mu = jnp.mean(x, axis=-1, keepdims=True)
    var = jnp.mean((x - mu) ** 2, axis=-1, keepdims=True)
    xn = (x - mu) * jax.lax.rsqrt(var + LN_EPS) * ln_gamma + ln_beta

    qkv = xn @ w_qkv                                            # (B, N, 3*h*d)
    qkv = qkv.reshape(B, N, h, 3, d).transpose(0, 2, 1, 3, 4)   # b h n 3 d
    q, k, v = qkv[..., 0, :], qkv[..., 1, :], qkv[..., 2, :]
    dots = jnp.einsum('bhid,bhjd->bhij', q, k) * SCALE
    adj = None if adjacency_mat is None else adjacency_mat[:, None]
    if mask is not None:
        m2 = mask[:, None, :, None] & mask[:, None, None, :]
        dots = jnp.where(m2, dots, NEG_BIG)
        if adj is not None:
            adj = jnp.where(m2, adj, 0.0)
    attn = jax.nn.softmax(dots, axis=-1) * LA
    if adj is not None:
        attn = attn + LG * adj
    out = jnp.einsum('bhij,bhjd->bhid', attn, v)
    out = out.transpose(0, 2, 1, 3).reshape(B, N, h * d)
    return out @ w_out + b_out


def _masked_close(out, ref, mask, rtol, atol):
    """Compare where mask is True (masked/padded query rows hold undefined
    values in both implementations and are not part of the module contract)."""
    out = np.asarray(out, dtype=np.float32)
    ref = np.asarray(ref, dtype=np.float32)
    if mask is not None:
        m = np.asarray(mask)[:, :, None].astype(np.float32)
        out = out * m
        ref = ref * m
    return np.allclose(out, ref, rtol=rtol, atol=atol)


if __name__ == "__main__":
    key = jax.random.PRNGKey(0)
    (kx, kg, kb2, kw1, kw2, kb, km, ka,
     kx2, km2, ka2) = jax.random.split(key, 11)

    B, N = 2, 8
    x = jax.random.normal(kx, (B, N, DIM), jnp.float32)
    ln_g = 1.0 + 0.05 * jax.random.normal(kg, (DIM,), jnp.float32)
    ln_b = 0.05 * jax.random.normal(kb2, (DIM,), jnp.float32)
    w_qkv = 0.1 * jax.random.normal(kw1, (DIM, 3 * INNER), jnp.float32)
    w_out = 0.1 * jax.random.normal(kw2, (INNER, DIM), jnp.float32)
    b_out = 0.1 * jax.random.normal(kb, (DIM,), jnp.float32)
    mask = jax.random.bernoulli(km, 0.8, (B, N))
    adjacency = jax.random.bernoulli(ka, 0.3, (B, N, N)).astype(jnp.float32)

    ref = prenorm_attention_ref(x, ln_g, ln_b, w_qkv, w_out, b_out,
                                mask=mask, adjacency_mat=adjacency)

    # 1) f32 MXU operands, exact reciprocal -> tight tolerance.
    out = jax.block_until_ready(prenorm_attention_pallas(
        x, ln_g, ln_b, w_qkv, w_out, b_out, mask=mask, adjacency_mat=adjacency,
        approx_recip=False))
    assert out.shape == (B, N, DIM)
    assert _masked_close(out, ref, mask, 1e-4, 1e-4), "f32/exact path mismatch"

    # 2) default fast path: EUP approximate reciprocal -> slightly looser tol.
    out_fast = jax.block_until_ready(prenorm_attention_pallas(
        x, ln_g, ln_b, w_qkv, w_out, b_out, mask=mask, adjacency_mat=adjacency))
    assert _masked_close(out_fast, ref, mask, 1e-2, 1e-2), "approx-recip mismatch"

    # 3) adjacency=None path: no (B, N, N) input is created or DMA'd.
    ref_na = prenorm_attention_ref(x, ln_g, ln_b, w_qkv, w_out, b_out,
                                   mask=mask, adjacency_mat=None)
    out_na = jax.block_until_ready(prenorm_attention_pallas(
        x, ln_g, ln_b, w_qkv, w_out, b_out, mask=mask, approx_recip=False))
    assert _masked_close(out_na, ref_na, mask, 1e-4, 1e-4), "no-adjacency mismatch"

    # 4) bf16 MXU operands with f32 accumulation (valid on v5e/v6e/v7x MXUs).
    out_bf16 = jax.block_until_ready(prenorm_attention_pallas(
        x, ln_g, ln_b, w_qkv, w_out, b_out, mask=mask, adjacency_mat=adjacency,
        mxu_dtype=jnp.bfloat16))
    assert _masked_close(out_bf16, ref, mask, 1e-1, 1e-1), "bf16 path mismatch"

    # 5) larger batch: exercises block_b > 1 (flattened attention with the
    #    block-diagonal same-batch mask), N padding, and the block/VMEM picker.
    B2, N2 = 32, 10
    x2 = jax.random.normal(kx2, (B2, N2, DIM), jnp.float32)
    mask2 = jax.random.bernoulli(km2, 0.85, (B2, N2))
    adj2 = jax.random.bernoulli(ka2, 0.3, (B2, N2, N2)).astype(jnp.float32)
    ref2 = prenorm_attention_ref(x2, ln_g, ln_b, w_qkv, w_out, b_out,
                                 mask=mask2, adjacency_mat=adj2)
    out2 = jax.block_until_ready(prenorm_attention_pallas(
        x2, ln_g, ln_b, w_qkv, w_out, b_out, mask=mask2, adjacency_mat=adj2,
        approx_recip=False))
    assert _masked_close(out2, ref2, mask2, 1e-4, 1e-4), "block_b>1 path mismatch"

    print("KERNEL_OK")
</pallas_src>

<mosaic_0001>
module attributes {stable_mosaic.version = 11 : i64} {
  func.func @_prenorm_attn_kernel(%arg0: i32, %arg1: memref<8x128xf32, #tpu.memory_space<vmem>>, %arg2: memref<128x234xf32, #tpu.memory_space<vmem>>, %arg3: memref<6x13x128xf32, #tpu.memory_space<vmem>>, %arg4: memref<1x128xf32, #tpu.memory_space<vmem>>, %arg5: memref<1x128xf32, #tpu.memory_space<vmem>>, %arg6: memref<1x128xf32, #tpu.memory_space<vmem>>, %arg7: memref<8x1xf32, #tpu.memory_space<vmem>>, %arg8: memref<1x1x8xf32, #tpu.memory_space<vmem>>, %arg9: memref<1x8x8xf32, #tpu.memory_space<vmem>>, %arg10: memref<8x128xf32, #tpu.memory_space<vmem>>) attributes {dimension_semantics = [#tpu.dimension_semantics<parallel>], iteration_bounds = array<i64: 2>, scalar_prefetch = 0 : i64, scratch_operands = 0 : i64, tpu.core_type = #tpu.core_type<tc>, window_params = [{transform_indices = @transform_0, window_bounds = array<i64: 8, 128>}, {pipeline_mode = #tpu.pipeline_mode<synchronous>, transform_indices = @transform_1, window_bounds = array<i64: 128, 234>}, {pipeline_mode = #tpu.pipeline_mode<synchronous>, transform_indices = @transform_2, window_bounds = array<i64: 6, 13, 128>}, {pipeline_mode = #tpu.pipeline_mode<synchronous>, transform_indices = @transform_3, window_bounds = array<i64: 1, 128>}, {pipeline_mode = #tpu.pipeline_mode<synchronous>, transform_indices = @transform_4, window_bounds = array<i64: 1, 128>}, {pipeline_mode = #tpu.pipeline_mode<synchronous>, transform_indices = @transform_5, window_bounds = array<i64: 1, 128>}, {transform_indices = @transform_6, window_bounds = array<i64: 8, 1>}, {transform_indices = @transform_7, window_bounds = array<i64: 1, 1, 8>}, {transform_indices = @transform_8, window_bounds = array<i64: 1, 8, 8>}, {transform_indices = @transform_9, window_bounds = array<i64: 8, 128>}]} {
    %c0 = arith.constant 0 : index
    %c0_0 = arith.constant 0 : index
    %0 = vector.load %arg1[%c0, %c0_0] : memref<8x128xf32, #tpu.memory_space<vmem>>, vector<8x128xf32>
    %1 = tpu.iota {dimensions = array<i32: 1>} : vector<1x128xi32>
    %c78_i32 = arith.constant 78 : i32
    %2 = vector.broadcast %c78_i32 : i32 to vector<1x128xi32>
    %3 = arith.cmpi slt, %1, %2 : vector<1x128xi32>
    %4 = arith.extui %3 : vector<1x128xi1> to vector<1x128xi32>
    %5 = arith.sitofp %4 : vector<1x128xi32> to vector<1x128xf32>
    %cst = arith.constant dense<0.000000e+00> : vector<8xf32>
    %6 = vector.multi_reduction <add>, %0, %cst [1] : vector<8x128xf32> to vector<8xf32>
    %7 = vector.shape_cast %6 : vector<8xf32> to vector<8x1xf32>
    %cst_1 = arith.constant 0.012820513 : f32
    %8 = vector.broadcast %cst_1 : f32 to vector<8x1xf32>
    %9 = arith.mulf %7, %8 : vector<8x1xf32>
    %10 = vector.broadcast %9 : vector<8x1xf32> to vector<8x128xf32>
    %11 = arith.subf %0, %10 : vector<8x128xf32>
    %12 = vector.broadcast %5 : vector<1x128xf32> to vector<8x128xf32>
    %13 = arith.mulf %11, %12 : vector<8x128xf32>
    %14 = arith.mulf %13, %13 : vector<8x128xf32>
    %cst_2 = arith.constant dense<0.000000e+00> : vector<8xf32>
    %15 = vector.multi_reduction <add>, %14, %cst_2 [1] : vector<8x128xf32> to vector<8xf32>
    %16 = vector.shape_cast %15 : vector<8xf32> to vector<8x1xf32>
    %cst_3 = arith.constant 0.012820513 : f32
    %17 = vector.broadcast %cst_3 : f32 to vector<8x1xf32>
    %18 = arith.mulf %16, %17 : vector<8x1xf32>
    %cst_4 = arith.constant 9.99999974E-6 : f32
    %19 = vector.broadcast %cst_4 : f32 to vector<8x1xf32>
    %20 = arith.addf %18, %19 : vector<8x1xf32>
    %21 = math.rsqrt %20 : vector<8x1xf32>
    %22 = vector.broadcast %21 : vector<8x1xf32> to vector<8x128xf32>
    %23 = arith.mulf %13, %22 : vector<8x128xf32>
    %c0_5 = arith.constant 0 : index
    %c0_6 = arith.constant 0 : index
    %24 = vector.load %arg5[%c0_5, %c0_6] : memref<1x128xf32, #tpu.memory_space<vmem>>, vector<1x128xf32>
    %25 = vector.broadcast %24 : vector<1x128xf32> to vector<8x128xf32>
    %26 = arith.mulf %23, %25 : vector<8x128xf32>
    %c0_7 = arith.constant 0 : index
    %c0_8 = arith.constant 0 : index
    %27 = vector.load %arg6[%c0_7, %c0_8] : memref<1x128xf32, #tpu.memory_space<vmem>>, vector<1x128xf32>
    %28 = vector.broadcast %27 : vector<1x128xf32> to vector<8x128xf32>
    %29 = arith.addf %26, %28 : vector<8x128xf32>
    %c0_9 = arith.constant 0 : index
    %c0_10 = arith.constant 0 : index
    %30 = vector.load %arg2[%c0_9, %c0_10] : memref<128x234xf32, #tpu.memory_space<vmem>>, vector<128x234xf32>
    %cst_11 = arith.constant dense<0.000000e+00> : vector<8x234xf32>
    %31 = tpu.matmul %29, %30, %cst_11 {dimension_numbers = #tpu.dot_dimension_numbers<[1], [0], [0], [1], [0, 0, 1, 1], [], []>} : vector<8x128xf32>, vector<128x234xf32>, vector<8x234xf32> -> vector<8x234xf32>
    %c0_12 = arith.constant 0 : index
    %c0_13 = arith.constant 0 : index
    %32 = vector.load %arg7[%c0_12, %c0_13] : memref<8x1xf32, #tpu.memory_space<vmem>>, vector<8x1xf32>
    %c0_14 = arith.constant 0 : index
    %c0_15 = arith.constant 0 : index
    %c0_16 = arith.constant 0 : index
    %33 = vector.load %arg8[%c0_14, %c0_15, %c0_16] : memref<1x1x8xf32, #tpu.memory_space<vmem>>, vector<1x1x8xf32>
    %34 = vector.shape_cast %33 : vector<1x1x8xf32> to vector<1x8xf32>
    %35 = vector.broadcast %32 : vector<8x1xf32> to vector<8x8xf32>
    %36 = vector.broadcast %34 : vector<1x8xf32> to vector<8x8xf32>
    %37 = arith.cmpf oeq, %35, %36 : vector<8x8xf32>
    %cst_17 = arith.constant 5.000000e-01 : f32
    %38 = vector.broadcast %cst_17 : f32 to vector<8x1xf32>
    %39 = arith.cmpf ogt, %32, %38 : vector<8x1xf32>
    %40 = vector.broadcast %39 : vector<8x1xi1> to vector<8x8xi1>
    %41 = arith.andi %37, %40 : vector<8x8xi1>
    %cst_18 = arith.constant 0.000000e+00 : f32
    %cst_19 = arith.constant -1.000000e+30 : f32
    %42 = vector.broadcast %cst_18 : f32 to vector<8x8xf32>
    %43 = vector.broadcast %cst_19 : f32 to vector<8x8xf32>
    %44 = arith.select %41, %42, %43 : vector<8x8xi1>, vector<8x8xf32>
    %cst_20 = arith.constant 5.000000e-01 : f32
    %45 = vector.broadcast %cst_20 : f32 to vector<8x1xf32>
    %46 = arith.cmpf ogt, %32, %45 : vector<8x1xf32>
    %47 = arith.extui %46 : vector<8x1xi1> to vector<8x1xi32>
    %48 = arith.sitofp %47 : vector<8x1xi32> to vector<8x1xf32>
    %cst_21 = arith.constant 0.000000e+00 : f32
    %49 = vector.broadcast %cst_21 : f32 to vector<8x128xf32>
    %cst_22 = arith.constant 0.000000e+00 : f32
    %50 = vector.broadcast %cst_22 : f32 to vector<8x128xf32>
    %51 = vector.extract_strided_slice %31 {offsets = [0, 0], sizes = [8, 13], strides = [1, 1]} : vector<8x234xf32> to vector<8x13xf32>
    %52 = vector.extract_strided_slice %31 {offsets = [0, 78], sizes = [8, 13], strides = [1, 1]} : vector<8x234xf32> to vector<8x13xf32>
    %53 = vector.extract_strided_slice %31 {offsets = [0, 156], sizes = [8, 13], strides = [1, 1]} : vector<8x234xf32> to vector<8x13xf32>
    %cst_23 = arith.constant dense<0.000000e+00> : vector<8x8xf32>
    %54 = tpu.matmul %51, %52, %cst_23 {dimension_numbers = #tpu.dot_dimension_numbers<[1], [1], [0], [0], [0, 0, 1, 0], [], []>} : vector<8x13xf32>, vector<8x13xf32>, vector<8x8xf32> -> vector<8x8xf32>
    %55 = arith.addf %54, %44 : vector<8x8xf32>
    %cst_24 = arith.constant dense<0xFF800000> : vector<8xf32>
    %56 = vector.multi_reduction <maximumf>, %55, %cst_24 [1] : vector<8x8xf32> to vector<8xf32>
    %57 = vector.shape_cast %56 : vector<8xf32> to vector<8x1xf32>
    %58 = vector.broadcast %57 : vector<8x1xf32> to vector<8x8xf32>
    %59 = arith.subf %55, %58 : vector<8x8xf32>
    %60 = math.exp %59 : vector<8x8xf32>
    %cst_25 = arith.constant dense<0.000000e+00> : vector<8xf32>
    %61 = vector.multi_reduction <add>, %60, %cst_25 [1] : vector<8x8xf32> to vector<8xf32>
    %62 = vector.shape_cast %61 : vector<8xf32> to vector<8x1xf32>
    %63 = tpu.reciprocal %62 : vector<8x1xf32> -> vector<8x1xf32>
    %64 = vector.broadcast %63 : vector<8x1xf32> to vector<8x8xf32>
    %65 = arith.mulf %60, %64 : vector<8x8xf32>
    %c0_26 = arith.constant 0 : index
    %c0_27 = arith.constant 0 : index
    %c0_28 = arith.constant 0 : index
    %66 = vector.load %arg3[%c0_26, %c0_27, %c0_28] : memref<6x13x128xf32, #tpu.memory_space<vmem>>, vector<1x13x128xf32>
    %67 = vector.shape_cast %66 : vector<1x13x128xf32> to vector<13x128xf32>
    %cst_29 = arith.constant dense<0.000000e+00> : vector<8x128xf32>
    %68 = tpu.matmul %53, %67, %cst_29 {dimension_numbers = #tpu.dot_dimension_numbers<[1], [0], [0], [1], [0, 0, 1, 1], [], []>} : vector<8x13xf32>, vector<13x128xf32>, vector<8x128xf32> -> vector<8x128xf32>
    %cst_30 = arith.constant dense<0.000000e+00> : vector<8x128xf32>
    %69 = tpu.matmul %65, %68, %cst_30 {dimension_numbers = #tpu.dot_dimension_numbers<[1], [0], [0], [1], [0, 0, 1, 1], [], []>} : vector<8x8xf32>, vector<8x128xf32>, vector<8x128xf32> -> vector<8x128xf32>
    %70 = arith.addf %49, %69 : vector<8x128xf32>
    %71 = arith.addf %50, %68 : vector<8x128xf32>
    %72 = vector.extract_strided_slice %31 {offsets = [0, 13], sizes = [8, 13], strides = [1, 1]} : vector<8x234xf32> to vector<8x13xf32>
    %73 = vector.extract_strided_slice %31 {offsets = [0, 91], sizes = [8, 13], strides = [1, 1]} : vector<8x234xf32> to vector<8x13xf32>
    %74 = vector.extract_strided_slice %31 {offsets = [0, 169], sizes = [8, 13], strides = [1, 1]} : vector<8x234xf32> to vector<8x13xf32>
    %cst_31 = arith.constant dense<0.000000e+00> : vector<8x8xf32>
    %75 = tpu.matmul %72, %73, %cst_31 {dimension_numbers = #tpu.dot_dimension_numbers<[1], [1], [0], [0], [0, 0, 1, 0], [], []>} : vector<8x13xf32>, vector<8x13xf32>, vector<8x8xf32> -> vector<8x8xf32>
    %76 = arith.addf %75, %44 : vector<8x8xf32>
    %cst_32 = arith.constant dense<0xFF800000> : vector<8xf32>
    %77 = vector.multi_reduction <maximumf>, %76, %cst_32 [1] : vector<8x8xf32> to vector<8xf32>
    %78 = vector.shape_cast %77 : vector<8xf32> to vector<8x1xf32>
    %79 = vector.broadcast %78 : vector<8x1xf32> to vector<8x8xf32>
    %80 = arith.subf %76, %79 : vector<8x8xf32>
    %81 = math.exp %80 : vector<8x8xf32>
    %cst_33 = arith.constant dense<0.000000e+00> : vector<8xf32>
    %82 = vector.multi_reduction <add>, %81, %cst_33 [1] : vector<8x8xf32> to vector<8xf32>
    %83 = vector.shape_cast %82 : vector<8xf32> to vector<8x1xf32>
    %84 = tpu.reciprocal %83 : vector<8x1xf32> -> vector<8x1xf32>
    %85 = vector.broadcast %84 : vector<8x1xf32> to vector<8x8xf32>
    %86 = arith.mulf %81, %85 : vector<8x8xf32>
    %c1 = arith.constant 1 : index
    %c0_34 = arith.constant 0 : index
    %c0_35 = arith.constant 0 : index
    %87 = vector.load %arg3[%c1, %c0_34, %c0_35] : memref<6x13x128xf32, #tpu.memory_space<vmem>>, vector<1x13x128xf32>
    %88 = vector.shape_cast %87 : vector<1x13x128xf32> to vector<13x128xf32>
    %cst_36 = arith.constant dense<0.000000e+00> : vector<8x128xf32>
    %89 = tpu.matmul %74, %88, %cst_36 {dimension_numbers = #tpu.dot_dimension_numbers<[1], [0], [0], [1], [0, 0, 1, 1], [], []>} : vector<8x13xf32>, vector<13x128xf32>, vector<8x128xf32> -> vector<8x128xf32>
    %cst_37 = arith.constant dense<0.000000e+00> : vector<8x128xf32>
    %90 = tpu.matmul %86, %89, %cst_37 {dimension_numbers = #tpu.dot_dimension_numbers<[1], [0], [0], [1], [0, 0, 1, 1], [], []>} : vector<8x8xf32>, vector<8x128xf32>, vector<8x128xf32> -> vector<8x128xf32>
    %91 = arith.addf %70, %90 : vector<8x128xf32>
    %92 = arith.addf %71, %89 : vector<8x128xf32>
    %93 = vector.extract_strided_slice %31 {offsets = [0, 26], sizes = [8, 13], strides = [1, 1]} : vector<8x234xf32> to vector<8x13xf32>
    %94 = vector.extract_strided_slice %31 {offsets = [0, 104], sizes = [8, 13], strides = [1, 1]} : vector<8x234xf32> to vector<8x13xf32>
    %95 = vector.extract_strided_slice %31 {offsets = [0, 182], sizes = [8, 13], strides = [1, 1]} : vector<8x234xf32> to vector<8x13xf32>
    %cst_38 = arith.constant dense<0.000000e+00> : vector<8x8xf32>
    %96 = tpu.matmul %93, %94, %cst_38 {dimension_numbers = #tpu.dot_dimension_numbers<[1], [1], [0], [0], [0, 0, 1, 0], [], []>} : vector<8x13xf32>, vector<8x13xf32>, vector<8x8xf32> -> vector<8x8xf32>
    %97 = arith.addf %96, %44 : vector<8x8xf32>
    %cst_39 = arith.constant dense<0xFF800000> : vector<8xf32>
    %98 = vector.multi_reduction <maximumf>, %97, %cst_39 [1] : vector<8x8xf32> to vector<8xf32>
    %99 = vector.shape_cast %98 : vector<8xf32> to vector<8x1xf32>
    %100 = vector.broadcast %99 : vector<8x1xf32> to vector<8x8xf32>
    %101 = arith.subf %97, %100 : vector<8x8xf32>
    %102 = math.exp %101 : vector<8x8xf32>
    %cst_40 = arith.constant dense<0.000000e+00> : vector<8xf32>
    %103 = vector.multi_reduction <add>, %102, %cst_40 [1] : vector<8x8xf32> to vector<8xf32>
    %104 = vector.shape_cast %103 : vector<8xf32> to vector<8x1xf32>
    %105 = tpu.reciprocal %104 : vector<8x1xf32> -> vector<8x1xf32>
    %106 = vector.broadcast %105 : vector<8x1xf32> to vector<8x8xf32>
    %107 = arith.mulf %102, %106 : vector<8x8xf32>
    %c2 = arith.constant 2 : index
    %c0_41 = arith.constant 0 : index
    %c0_42 = arith.constant 0 : index
    %108 = vector.load %arg3[%c2, %c0_41, %c0_42] : memref<6x13x128xf32, #tpu.memory_space<vmem>>, vector<1x13x128xf32>
    %109 = vector.shape_cast %108 : vector<1x13x128xf32> to vector<13x128xf32>
    %cst_43 = arith.constant dense<0.000000e+00> : vector<8x128xf32>
    %110 = tpu.matmul %95, %109, %cst_43 {dimension_numbers = #tpu.dot_dimension_numbers<[1], [0], [0], [1], [0, 0, 1, 1], [], []>} : vector<8x13xf32>, vector<13x128xf32>, vector<8x128xf32> -> vector<8x128xf32>
    %cst_44 = arith.constant dense<0.000000e+00> : vector<8x128xf32>
    %111 = tpu.matmul %107, %110, %cst_44 {dimension_numbers = #tpu.dot_dimension_numbers<[1], [0], [0], [1], [0, 0, 1, 1], [], []>} : vector<8x8xf32>, vector<8x128xf32>, vector<8x128xf32> -> vector<8x128xf32>
    %112 = arith.addf %91, %111 : vector<8x128xf32>
    %113 = arith.addf %92, %110 : vector<8x128xf32>
    %114 = vector.extract_strided_slice %31 {offsets = [0, 39], sizes = [8, 13], strides = [1, 1]} : vector<8x234xf32> to vector<8x13xf32>
    %115 = vector.extract_strided_slice %31 {offsets = [0, 117], sizes = [8, 13], strides = [1, 1]} : vector<8x234xf32> to vector<8x13xf32>
    %116 = vector.extract_strided_slice %31 {offsets = [0, 195], sizes = [8, 13], strides = [1, 1]} : vector<8x234xf32> to vector<8x13xf32>
    %cst_45 = arith.constant dense<0.000000e+00> : vector<8x8xf32>
    %117 = tpu.matmul %114, %115, %cst_45 {dimension_numbers = #tpu.dot_dimension_numbers<[1], [1], [0], [0], [0, 0, 1, 0], [], []>} : vector<8x13xf32>, vector<8x13xf32>, vector<8x8xf32> -> vector<8x8xf32>
    %118 = arith.addf %117, %44 : vector<8x8xf32>
    %cst_46 = arith.constant dense<0xFF800000> : vector<8xf32>
    %119 = vector.multi_reduction <maximumf>, %118, %cst_46 [1] : vector<8x8xf32> to vector<8xf32>
    %120 = vector.shape_cast %119 : vector<8xf32> to vector<8x1xf32>
    %121 = vector.broadcast %120 : vector<8x1xf32> to vector<8x8xf32>
    %122 = arith.subf %118, %121 : vector<8x8xf32>
    %123 = math.exp %122 : vector<8x8xf32>
    %cst_47 = arith.constant dense<0.000000e+00> : vector<8xf32>
    %124 = vector.multi_reduction <add>, %123, %cst_47 [1] : vector<8x8xf32> to vector<8xf32>
    %125 = vector.shape_cast %124 : vector<8xf32> to vector<8x1xf32>
    %126 = tpu.reciprocal %125 : vector<8x1xf32> -> vector<8x1xf32>
    %127 = vector.broadcast %126 : vector<8x1xf32> to vector<8x8xf32>
    %128 = arith.mulf %123, %127 : vector<8x8xf32>
    %c3 = arith.constant 3 : index
    %c0_48 = arith.constant 0 : index
    %c0_49 = arith.constant 0 : index
    %129 = vector.load %arg3[%c3, %c0_48, %c0_49] : memref<6x13x128xf32, #tpu.memory_space<vmem>>, vector<1x13x128xf32>
    %130 = vector.shape_cast %129 : vector<1x13x128xf32> to vector<13x128xf32>
    %cst_50 = arith.constant dense<0.000000e+00> : vector<8x128xf32>
    %131 = tpu.matmul %116, %130, %cst_50 {dimension_numbers = #tpu.dot_dimension_numbers<[1], [0], [0], [1], [0, 0, 1, 1], [], []>} : vector<8x13xf32>, vector<13x128xf32>, vector<8x128xf32> -> vector<8x128xf32>
    %cst_51 = arith.constant dense<0.000000e+00> : vector<8x128xf32>
    %132 = tpu.matmul %128, %131, %cst_51 {dimension_numbers = #tpu.dot_dimension_numbers<[1], [0], [0], [1], [0, 0, 1, 1], [], []>} : vector<8x8xf32>, vector<8x128xf32>, vector<8x128xf32> -> vector<8x128xf32>
    %133 = arith.addf %112, %132 : vector<8x128xf32>
    %134 = arith.addf %113, %131 : vector<8x128xf32>
    %135 = vector.extract_strided_slice %31 {offsets = [0, 52], sizes = [8, 13], strides = [1, 1]} : vector<8x234xf32> to vector<8x13xf32>
    %136 = vector.extract_strided_slice %31 {offsets = [0, 130], sizes = [8, 13], strides = [1, 1]} : vector<8x234xf32> to vector<8x13xf32>
    %137 = vector.extract_strided_slice %31 {offsets = [0, 208], sizes = [8, 13], strides = [1, 1]} : vector<8x234xf32> to vector<8x13xf32>
    %cst_52 = arith.constant dense<0.000000e+00> : vector<8x8xf32>
    %138 = tpu.matmul %135, %136, %cst_52 {dimension_numbers = #tpu.dot_dimension_numbers<[1], [1], [0], [0], [0, 0, 1, 0], [], []>} : vector<8x13xf32>, vector<8x13xf32>, vector<8x8xf32> -> vector<8x8xf32>
    %139 = arith.addf %138, %44 : vector<8x8xf32>
    %cst_53 = arith.constant dense<0xFF800000> : vector<8xf32>
    %140 = vector.multi_reduction <maximumf>, %139, %cst_53 [1] : vector<8x8xf32> to vector<8xf32>
    %141 = vector.shape_cast %140 : vector<8xf32> to vector<8x1xf32>
    %142 = vector.broadcast %141 : vector<8x1xf32> to vector<8x8xf32>
    %143 = arith.subf %139, %142 : vector<8x8xf32>
    %144 = math.exp %143 : vector<8x8xf32>
    %cst_54 = arith.constant dense<0.000000e+00> : vector<8xf32>
    %145 = vector.multi_reduction <add>, %144, %cst_54 [1] : vector<8x8xf32> to vector<8xf32>
    %146 = vector.shape_cast %145 : vector<8xf32> to vector<8x1xf32>
    %147 = tpu.reciprocal %146 : vector<8x1xf32> -> vector<8x1xf32>
    %148 = vector.broadcast %147 : vector<8x1xf32> to vector<8x8xf32>
    %149 = arith.mulf %144, %148 : vector<8x8xf32>
    %c4 = arith.constant 4 : index
    %c0_55 = arith.constant 0 : index
    %c0_56 = arith.constant 0 : index
    %150 = vector.load %arg3[%c4, %c0_55, %c0_56] : memref<6x13x128xf32, #tpu.memory_space<vmem>>, vector<1x13x128xf32>
    %151 = vector.shape_cast %150 : vector<1x13x128xf32> to vector<13x128xf32>
    %cst_57 = arith.constant dense<0.000000e+00> : vector<8x128xf32>
    %152 = tpu.matmul %137, %151, %cst_57 {dimension_numbers = #tpu.dot_dimension_numbers<[1], [0], [0], [1], [0, 0, 1, 1], [], []>} : vector<8x13xf32>, vector<13x128xf32>, vector<8x128xf32> -> vector<8x128xf32>
    %cst_58 = arith.constant dense<0.000000e+00> : vector<8x128xf32>
    %153 = tpu.matmul %149, %152, %cst_58 {dimension_numbers = #tpu.dot_dimension_numbers<[1], [0], [0], [1], [0, 0, 1, 1], [], []>} : vector<8x8xf32>, vector<8x128xf32>, vector<8x128xf32> -> vector<8x128xf32>
    %154 = arith.addf %133, %153 : vector<8x128xf32>
    %155 = arith.addf %134, %152 : vector<8x128xf32>
    %156 = vector.extract_strided_slice %31 {offsets = [0, 65], sizes = [8, 13], strides = [1, 1]} : vector<8x234xf32> to vector<8x13xf32>
    %157 = vector.extract_strided_slice %31 {offsets = [0, 143], sizes = [8, 13], strides = [1, 1]} : vector<8x234xf32> to vector<8x13xf32>
    %158 = vector.extract_strided_slice %31 {offsets = [0, 221], sizes = [8, 13], strides = [1, 1]} : vector<8x234xf32> to vector<8x13xf32>
    %cst_59 = arith.constant dense<0.000000e+00> : vector<8x8xf32>
    %159 = tpu.matmul %156, %157, %cst_59 {dimension_numbers = #tpu.dot_dimension_numbers<[1], [1], [0], [0], [0, 0, 1, 0], [], []>} : vector<8x13xf32>, vector<8x13xf32>, vector<8x8xf32> -> vector<8x8xf32>
    %160 = arith.addf %159, %44 : vector<8x8xf32>
    %cst_60 = arith.constant dense<0xFF800000> : vector<8xf32>
    %161 = vector.multi_reduction <maximumf>, %160, %cst_60 [1] : vector<8x8xf32> to vector<8xf32>
    %162 = vector.shape_cast %161 : vector<8xf32> to vector<8x1xf32>
    %163 = vector.broadcast %162 : vector<8x1xf32> to vector<8x8xf32>
    %164 = arith.subf %160, %163 : vector<8x8xf32>
    %165 = math.exp %164 : vector<8x8xf32>
    %cst_61 = arith.constant dense<0.000000e+00> : vector<8xf32>
    %166 = vector.multi_reduction <add>, %165, %cst_61 [1] : vector<8x8xf32> to vector<8xf32>
    %167 = vector.shape_cast %166 : vector<8xf32> to vector<8x1xf32>
    %168 = tpu.reciprocal %167 : vector<8x1xf32> -> vector<8x1xf32>
    %169 = vector.broadcast %168 : vector<8x1xf32> to vector<8x8xf32>
    %170 = arith.mulf %165, %169 : vector<8x8xf32>
    %c5 = arith.constant 5 : index
    %c0_62 = arith.constant 0 : index
    %c0_63 = arith.constant 0 : index
    %171 = vector.load %arg3[%c5, %c0_62, %c0_63] : memref<6x13x128xf32, #tpu.memory_space<vmem>>, vector<1x13x128xf32>
    %172 = vector.shape_cast %171 : vector<1x13x128xf32> to vector<13x128xf32>
    %cst_64 = arith.constant dense<0.000000e+00> : vector<8x128xf32>
    %173 = tpu.matmul %158, %172, %cst_64 {dimension_numbers = #tpu.dot_dimension_numbers<[1], [0], [0], [1], [0, 0, 1, 1], [], []>} : vector<8x13xf32>, vector<13x128xf32>, vector<8x128xf32> -> vector<8x128xf32>
    %cst_65 = arith.constant dense<0.000000e+00> : vector<8x128xf32>
    %174 = tpu.matmul %170, %173, %cst_65 {dimension_numbers = #tpu.dot_dimension_numbers<[1], [0], [0], [1], [0, 0, 1, 1], [], []>} : vector<8x8xf32>, vector<8x128xf32>, vector<8x128xf32> -> vector<8x128xf32>
    %175 = arith.addf %154, %174 : vector<8x128xf32>
    %176 = arith.addf %155, %173 : vector<8x128xf32>
    %177 = vector.broadcast %48 : vector<8x1xf32> to vector<8x128xf32>
    %178 = arith.mulf %176, %177 : vector<8x128xf32>
    %179 = vector.shape_cast %178 : vector<8x128xf32> to vector<1x8x128xf32>
    %c0_66 = arith.constant 0 : index
    %c0_67 = arith.constant 0 : index
    %c0_68 = arith.constant 0 : index
    %180 = vector.load %arg9[%c0_66, %c0_67, %c0_68] : memref<1x8x8xf32, #tpu.memory_space<vmem>>, vector<1x8x8xf32>
    "tpu.trace_start"() <{level = 10 : i32, message = "bij,bjd->bid"}> : () -> ()
    %cst_69 = arith.constant dense<0.000000e+00> : vector<1x8x128xf32>
    %181 = tpu.matmul %180, %179, %cst_69 {dimension_numbers = #tpu.dot_dimension_numbers<[2], [1], [1], [2], [0, 0, 0, 1, 1, 2], [0], [0]>} : vector<1x8x8xf32>, vector<1x8x128xf32>, vector<1x8x128xf32> -> vector<1x8x128xf32>
    "tpu.trace_stop"() : () -> ()
    %182 = vector.shape_cast %181 : vector<1x8x128xf32> to vector<8x128xf32>
    %cst_70 = arith.constant 5.000000e-01 : f32
    %183 = vector.broadcast %cst_70 : f32 to vector<8x1xf32>
    %184 = arith.mulf %183, %48 : vector<8x1xf32>
    %185 = vector.broadcast %184 : vector<8x1xf32> to vector<8x128xf32>
    %186 = arith.mulf %185, %182 : vector<8x128xf32>
    %187 = arith.addf %175, %186 : vector<8x128xf32>
    %c0_71 = arith.constant 0 : index
    %c0_72 = arith.constant 0 : index
    %188 = vector.load %arg4[%c0_71, %c0_72] : memref<1x128xf32, #tpu.memory_space<vmem>>, vector<1x128xf32>
    %189 = vector.broadcast %188 : vector<1x128xf32> to vector<8x128xf32>
    %190 = arith.addf %187, %189 : vector<8x128xf32>
    %c0_73 = arith.constant 0 : index
    %c0_74 = arith.constant 0 : index
    %191 = vector.load %arg10[%c0_73, %c0_74] : memref<8x128xf32, #tpu.memory_space<vmem>>, vector<8x128xf32>
    tpu.vector_store %arg10[%c0_73, %c0_74], %190 {strides = array<i32>} : memref<8x128xf32, #tpu.memory_space<vmem>>, vector<8x128xf32>,
    return
  }
  func.func @transform_0(%arg0: i32) -> (i32, i32) {
    %c0_i32 = arith.constant 0 : i32
    %c0_i32_0 = arith.constant 0 : i32
    return %arg0, %c0_i32 : i32, i32
  }
  func.func @transform_1(%arg0: i32) -> (i32, i32) {
    %c0_i32 = arith.constant 0 : i32
    %c0_i32_0 = arith.constant 0 : i32
    %c0_i32_1 = arith.constant 0 : i32
    return %c0_i32, %c0_i32_0 : i32, i32
  }
  func.func @transform_2(%arg0: i32) -> (i32, i32, i32) {
    %c0_i32 = arith.constant 0 : i32
    %c0_i32_0 = arith.constant 0 : i32
    %c0_i32_1 = arith.constant 0 : i32
    %c0_i32_2 = arith.constant 0 : i32
    return %c0_i32, %c0_i32_0, %c0_i32_1 : i32, i32, i32
  }
  func.func @transform_3(%arg0: i32) -> (i32, i32) {
    %c0_i32 = arith.constant 0 : i32
    %c0_i32_0 = arith.constant 0 : i32
    %c0_i32_1 = arith.constant 0 : i32
    return %c0_i32, %c0_i32_0 : i32, i32
  }
  func.func @transform_4(%arg0: i32) -> (i32, i32) {
    %c0_i32 = arith.constant 0 : i32
    %c0_i32_0 = arith.constant 0 : i32
    %c0_i32_1 = arith.constant 0 : i32
    return %c0_i32, %c0_i32_0 : i32, i32
  }
  func.func @transform_5(%arg0: i32) -> (i32, i32) {
    %c0_i32 = arith.constant 0 : i32
    %c0_i32_0 = arith.constant 0 : i32
    %c0_i32_1 = arith.constant 0 : i32
    return %c0_i32, %c0_i32_0 : i32, i32
  }
  func.func @transform_6(%arg0: i32) -> (i32, i32) {
    %c0_i32 = arith.constant 0 : i32
    %c0_i32_0 = arith.constant 0 : i32
    return %arg0, %c0_i32 : i32, i32
  }
  func.func @transform_7(%arg0: i32) -> (i32, i32, i32) {
    %c0_i32 = arith.constant 0 : i32
    %c0_i32_0 = arith.constant 0 : i32
    %c0_i32_1 = arith.constant 0 : i32
    return %arg0, %c0_i32, %c0_i32_0 : i32, i32, i32
  }
  func.func @transform_8(%arg0: i32) -> (i32, i32, i32) {
    %c0_i32 = arith.constant 0 : i32
    %c0_i32_0 = arith.constant 0 : i32
    %c0_i32_1 = arith.constant 0 : i32
    return %arg0, %c0_i32, %c0_i32_0 : i32, i32, i32
  }
  func.func @transform_9(%arg0: i32) -> (i32, i32) {
    %c0_i32 = arith.constant 0 : i32
    %c0_i32_0 = arith.constant 0 : i32
    return %arg0, %c0_i32 : i32, i32
  }
}

</mosaic_0001>

<llo_original>
// kernel: tpu_custom_call.1
$region0: #{tpu_custom_call.1}
  #allocation0 [shape = 'u32[]', space=smem, size = 0x4, offset = 0x4, fixed_abs, tag = 'smem constant byte address 0x4 - core index']
  #allocation1 [shape = 'u32[144,128]{1,0:T(1,128)}', space=vmem, size = 0x12000, scoped, tag = 'internal scratch']
  %s0 = inlined_call_operand.vmem [shape: f32[16,128], index: 0, kind: input, shape index: {}]
  %s1 = inlined_call_operand.vmem [shape: f32[128,234], index: 1, kind: input, shape index: {}]
  %s2 = inlined_call_operand.vmem [shape: f32[6,13,128], index: 2, kind: input, shape index: {}]
  %s3 = inlined_call_operand.vmem [shape: f32[1,128], index: 3, kind: input, shape index: {}]
  %s4 = inlined_call_operand.vmem [shape: f32[1,128], index: 4, kind: input, shape index: {}]
  %s5 = inlined_call_operand.vmem [shape: f32[1,128], index: 5, kind: input, shape index: {}]
  %s6 = inlined_call_operand.vmem [shape: f32[16,1], index: 6, kind: input, shape index: {}]
  %s7 = inlined_call_operand.vmem [shape: f32[2,1,8], index: 7, kind: input, shape index: {}]
  %s8 = inlined_call_operand.vmem [shape: f32[2,8,8], index: 8, kind: input, shape index: {}]
  %s9 = inlined_call_operand.hbm [shape: f32[16,128], index: 9, kind: output, shape index: {}]
  %s10 = sld [smem:[#allocation0]]
  $region69: #{tpu_custom_call.1} parent=0
    _
  %s12 = ssub.s32 1, %s10
  %s13 = scalar_select 0, %s12, %s10
  $region1: #{tpu_custom_call.1} parent=0
    #allocation2 [shape = 'u8[8192]{0}', space=vmem, size = 0x2000, scoped, tag = 'output window, operand 0']
    #allocation3 [shape = 's32[2]{0}', space=sflag, size = 0x8, scoped, tag = 'scoped memory for tpu_custom_call.1']
    %14 = vsyncpa [#allocation3], 0
    %s15 = scalar_lea.sflag [#allocation3], 1
    %16 = vsyncpa %s15, 0
    loop: start=0, step=1, limit=4
    $region2: #{tpu_custom_call.1} parent=1 // loop_pre_header
      _
    $region3: #{tpu_custom_call.1} parent=1 // loop_header
      %s18 = sphi 0, %s22
      %p19 = scmp.ge.s32.totalorder %s18, 4
      %s28 = sphi 0, %s30
      %s31 = sphi 0, %s28
      %s32 = sphi 0, %s31
      %s48 = sphi 0, %s32
      %s52 = sphi 0, %s52
      %s54 = sphi 0, %s52
      %s55 = sphi 0, %s54
      %s69 = sphi 0, %s55
      %s73 = sphi 0, %s73
      %s75 = sphi 0, %s73
      %s76 = sphi 0, %s75
      %s90 = sphi 0, %s76
      %s94 = sphi 0, %s94
      %s96 = sphi 0, %s94
      %s97 = sphi 0, %s96
      %s111 = sphi 0, %s97
      %s115 = sphi 0, %s115
      %s117 = sphi 0, %s115
      %s118 = sphi 0, %s117
      %s132 = sphi 0, %s118
      %s136 = sphi 0, %s136
      %s138 = sphi 0, %s136
      %s139 = sphi 0, %s138
      %s153 = sphi 0, %s139
      %s159 = sphi 0, %s161
      %s162 = sphi 0, %s159
      %s163 = sphi 0, %s162
      %s179 = sphi 0, %s163
      %s185 = sphi 0, %s187
      %s188 = sphi 0, %s185
      %s189 = sphi 0, %s188
      %s205 = sphi 0, %s189
      %s211 = sphi 0, %s213
      %s214 = sphi 0, %s211
      %s215 = sphi 0, %s214
      %s231 = sphi 0, %s215
      %s237 = sphi 0, %s239
      %s240 = sphi 0, %s237
      %s241 = sphi 0, %s240
      %s257 = sphi 0, %s241
    $region4: #{tpu_custom_call.1} parent=1 // loop_header_branch
      %21 = sbr.rel (%p19) target = $region8
    $region5: #{tpu_custom_call.1} parent=1 // loop_body
      %s23 = ssub.s32 %s18, 1
      %s24 = ssub.s32 %s18, 2
      %s25 = sadd.s32 %s18, 1
      %s26 = ssub.s32 %s18, %s25
      %p27 = scmp.eq.s32.totalorder %s26, 0
      %s29 = sadd.s32 %s28, 1
      %s30 = scalar_select %p27, %s28, %s29
      %p33 = pneg %p27
      %p34 = scmp.eq.s32.totalorder %s18, 1
      %p35 = por %p33, %p34
      %p36 = scmp.ne.s32.totalorder %s28, %s31
      %p37 = scmp.eq.s32.totalorder %s18, 0
      %p38 = por %p36, %p37
      %p39 = scmp.ne.s32.totalorder %s28, %s31
      %p40 = scmp.eq.s32.totalorder %s23, 1
      %p41 = por %p39, %p40
      %p42 = scmp.ne.s32.totalorder %s31, %s32
      %p43 = scmp.eq.s32.totalorder %s23, 0
      %p44 = por %p42, %p43
      %p45 = scmp.ne.s32.totalorder %s31, %s32
      %p46 = scmp.eq.s32.totalorder %s24, 1
      %p47 = por %p45, %p46
      %p49 = scmp.ne.s32.totalorder %s32, %s48
      %p50 = scmp.eq.s32.totalorder %s24, 0
      %p51 = por %p49, %p50
      %s53 = sadd.s32 %s52, 1
      %p56 = scmp.eq.s32.totalorder %s18, 1
      %p57 = scmp.ne.s32.totalorder %s52, %s54
      %p58 = scmp.eq.s32.totalorder %s18, 0
      %p59 = por %p57, %p58
      %p60 = scmp.ne.s32.totalorder %s52, %s54
      %p61 = scmp.eq.s32.totalorder %s23, 1
      %p62 = por %p60, %p61
      %p63 = scmp.ne.s32.totalorder %s54, %s55
      %p64 = scmp.eq.s32.totalorder %s23, 0
      %p65 = por %p63, %p64
      %p66 = scmp.ne.s32.totalorder %s54, %s55
      %p67 = scmp.eq.s32.totalorder %s24, 1
      %p68 = por %p66, %p67
      %p70 = scmp.ne.s32.totalorder %s55, %s69
      %p71 = scmp.eq.s32.totalorder %s24, 0
      %p72 = por %p70, %p71
      %s74 = sadd.s32 %s73, 1
      %p77 = scmp.eq.s32.totalorder %s18, 1
      %p78 = scmp.ne.s32.totalorder %s73, %s75
      %p79 = scmp.eq.s32.totalorder %s18, 0
      %p80 = por %p78, %p79
      %p81 = scmp.ne.s32.totalorder %s73, %s75
      %p82 = scmp.eq.s32.totalorder %s23, 1
      %p83 = por %p81, %p82
      %p84 = scmp.ne.s32.totalorder %s75, %s76
      %p85 = scmp.eq.s32.totalorder %s23, 0
      %p86 = por %p84, %p85
      %p87 = scmp.ne.s32.totalorder %s75, %s76
      %p88 = scmp.eq.s32.totalorder %s24, 1
      %p89 = por %p87, %p88
      %p91 = scmp.ne.s32.totalorder %s76, %s90
      %p92 = scmp.eq.s32.totalorder %s24, 0
      %p93 = por %p91, %p92
      %s95 = sadd.s32 %s94, 1
      %p98 = scmp.eq.s32.totalorder %s18, 1
      %p99 = scmp.ne.s32.totalorder %s94, %s96
      %p100 = scmp.eq.s32.totalorder %s18, 0
      %p101 = por %p99, %p100
      %p102 = scmp.ne.s32.totalorder %s94, %s96
      %p103 = scmp.eq.s32.totalorder %s23, 1
      %p104 = por %p102, %p103
      %p105 = scmp.ne.s32.totalorder %s96, %s97
      %p106 = scmp.eq.s32.totalorder %s23, 0
      %p107 = por %p105, %p106
      %p108 = scmp.ne.s32.totalorder %s96, %s97
      %p109 = scmp.eq.s32.totalorder %s24, 1
      %p110 = por %p108, %p109
      %p112 = scmp.ne.s32.totalorder %s97, %s111
      %p113 = scmp.eq.s32.totalorder %s24, 0
      %p114 = por %p112, %p113
      %s116 = sadd.s32 %s115, 1
      %p119 = scmp.eq.s32.totalorder %s18, 1
      %p120 = scmp.ne.s32.totalorder %s115, %s117
      %p121 = scmp.eq.s32.totalorder %s18, 0
      %p122 = por %p120, %p121
      %p123 = scmp.ne.s32.totalorder %s115, %s117
      %p124 = scmp.eq.s32.totalorder %s23, 1
      %p125 = por %p123, %p124
      %p126 = scmp.ne.s32.totalorder %s117, %s118
      %p127 = scmp.eq.s32.totalorder %s23, 0
      %p128 = por %p126, %p127
      %p129 = scmp.ne.s32.totalorder %s117, %s118
      %p130 = scmp.eq.s32.totalorder %s24, 1
      %p131 = por %p129, %p130
      %p133 = scmp.ne.s32.totalorder %s118, %s132
      %p134 = scmp.eq.s32.totalorder %s24, 0
      %p135 = por %p133, %p134
      %s137 = sadd.s32 %s136, 1
      %p140 = scmp.eq.s32.totalorder %s18, 1
      %p141 = scmp.ne.s32.totalorder %s136, %s138
      %p142 = scmp.eq.s32.totalorder %s18, 0
      %p143 = por %p141, %p142
      %p144 = scmp.ne.s32.totalorder %s136, %s138
      %p145 = scmp.eq.s32.totalorder %s23, 1
      %p146 = por %p144, %p145
      %p147 = scmp.ne.s32.totalorder %s138, %s139
      %p148 = scmp.eq.s32.totalorder %s23, 0
      %p149 = por %p147, %p148
      %p150 = scmp.ne.s32.totalorder %s138, %s139
      %p151 = scmp.eq.s32.totalorder %s24, 1
      %p152 = por %p150, %p151
      %p154 = scmp.ne.s32.totalorder %s139, %s153
      %p155 = scmp.eq.s32.totalorder %s24, 0
      %p156 = por %p154, %p155
      %s157 = ssub.s32 %s18, %s25
      %p158 = scmp.eq.s32.totalorder %s157, 0
      %s160 = sadd.s32 %s159, 1
      %s161 = scalar_select %p158, %s159, %s160
      %p164 = pneg %p158
      %p165 = scmp.eq.s32.totalorder %s18, 1
      %p166 = por %p164, %p165
      %p167 = scmp.ne.s32.totalorder %s159, %s162
      %p168 = scmp.eq.s32.totalorder %s18, 0
      %p169 = por %p167, %p168
      %p170 = scmp.ne.s32.totalorder %s159, %s162
      %p171 = scmp.eq.s32.totalorder %s23, 1
      %p172 = por %p170, %p171
      %p173 = scmp.ne.s32.totalorder %s162, %s163
      %p174 = scmp.eq.s32.totalorder %s23, 0
      %p175 = por %p173, %p174
      %p176 = scmp.ne.s32.totalorder %s162, %s163
      %p177 = scmp.eq.s32.totalorder %s24, 1
      %p178 = por %p176, %p177
      %p180 = scmp.ne.s32.totalorder %s163, %s179
      %p181 = scmp.eq.s32.totalorder %s24, 0
      %p182 = por %p180, %p181
      %s183 = ssub.s32 %s18, %s25
      %p184 = scmp.eq.s32.totalorder %s183, 0
      %s186 = sadd.s32 %s185, 1
      %s187 = scalar_select %p184, %s185, %s186
      %p190 = pneg %p184
      %p191 = scmp.eq.s32.totalorder %s18, 1
      %p192 = por %p190, %p191
      %p193 = scmp.ne.s32.totalorder %s185, %s188
      %p194 = scmp.eq.s32.totalorder %s18, 0
      %p195 = por %p193, %p194
      %p196 = scmp.ne.s32.totalorder %s185, %s188
      %p197 = scmp.eq.s32.totalorder %s23, 1
      %p198 = por %p196, %p197
      %p199 = scmp.ne.s32.totalorder %s188, %s189
      %p200 = scmp.eq.s32.totalorder %s23, 0
      %p201 = por %p199, %p200
      %p202 = scmp.ne.s32.totalorder %s188, %s189
      %p203 = scmp.eq.s32.totalorder %s24, 1
      %p204 = por %p202, %p203
      %p206 = scmp.ne.s32.totalorder %s189, %s205
      %p207 = scmp.eq.s32.totalorder %s24, 0
      %p208 = por %p206, %p207
      %s209 = ssub.s32 %s18, %s25
      %p210 = scmp.eq.s32.totalorder %s209, 0
      %s212 = sadd.s32 %s211, 1
      %s213 = scalar_select %p210, %s211, %s212
      %p216 = pneg %p210
      %p217 = scmp.eq.s32.totalorder %s18, 1
      %p218 = por %p216, %p217
      %p219 = scmp.ne.s32.totalorder %s211, %s214
      %p220 = scmp.eq.s32.totalorder %s18, 0
      %p221 = por %p219, %p220
      %p222 = scmp.ne.s32.totalorder %s211, %s214
      %p223 = scmp.eq.s32.totalorder %s23, 1
      %p224 = por %p222, %p223
      %p225 = scmp.ne.s32.totalorder %s214, %s215
      %p226 = scmp.eq.s32.totalorder %s23, 0
      %p227 = por %p225, %p226
      %p228 = scmp.ne.s32.totalorder %s214, %s215
      %p229 = scmp.eq.s32.totalorder %s24, 1
      %p230 = por %p228, %p229
      %p232 = scmp.ne.s32.totalorder %s215, %s231
      %p233 = scmp.eq.s32.totalorder %s24, 0
      %p234 = por %p232, %p233
      %s235 = ssub.s32 %s18, %s25
      %p236 = scmp.eq.s32.totalorder %s235, 0
      %s238 = sadd.s32 %s237, 1
      %s239 = scalar_select %p236, %s237, %s238
      %p242 = pneg %p236
      %p243 = scmp.eq.s32.totalorder %s18, 1
      %p244 = por %p242, %p243
      %p245 = scmp.ne.s32.totalorder %s237, %s240
      %p246 = scmp.eq.s32.totalorder %s18, 0
      %p247 = por %p245, %p246
      %p248 = scmp.ne.s32.totalorder %s237, %s240
      %p249 = scmp.eq.s32.totalorder %s23, 1
      %p250 = por %p248, %p249
      %p251 = scmp.ne.s32.totalorder %s240, %s241
      %p252 = scmp.eq.s32.totalorder %s23, 0
      %p253 = por %p251, %p252
      %p254 = scmp.ne.s32.totalorder %s240, %s241
      %p255 = scmp.eq.s32.totalorder %s24, 1
      %p256 = por %p254, %p255
      %p258 = scmp.ne.s32.totalorder %s241, %s257
      %p259 = scmp.eq.s32.totalorder %s24, 0
      %p260 = por %p258, %p259
      %p261 = scmp.le.s32.totalorder 1, %s18
      %p262 = scmp.lt.s32.totalorder %s18, 3
      %p263 = pnand %p261, %p262
      %p264 = pneg %p263
      // Predicated region
      $region9: #{tpu_custom_call.1} parent=5 // pred_check
        _
      $region10: #{tpu_custom_call.1} parent=5 // pred_check_branch
        %266 = sbr.rel (%p263) target = $region12
      $region11: #{tpu_custom_call.1} parent=5 // pred_region
        %s267 = ssub.s32 %s18, 1
        // Predicated region
        $region13: #{tpu_custom_call.1} parent=11 // pred_check
          %p268 = pneg %p65
        $region14: #{tpu_custom_call.1} parent=11 // pred_check_branch
          %270 = sbr.rel (%p268) target = $region16
        $region15: #{tpu_custom_call.1} parent=11 // pred_region
          _
        $region16: #{tpu_custom_call.1} parent=11 // pred_fallthru
          _
        // Predicated region
        $region17: #{tpu_custom_call.1} parent=11 // pred_check
          %p271 = pneg %p86
        $region18: #{tpu_custom_call.1} parent=11 // pred_check_branch
          %273 = sbr.rel (%p271) target = $region20
        $region19: #{tpu_custom_call.1} parent=11 // pred_region
          _
        $region20: #{tpu_custom_call.1} parent=11 // pred_fallthru
          _
        // Predicated region
        $region21: #{tpu_custom_call.1} parent=11 // pred_check
          %p274 = pneg %p107
        $region22: #{tpu_custom_call.1} parent=11 // pred_check_branch
          %276 = sbr.rel (%p274) target = $region24
        $region23: #{tpu_custom_call.1} parent=11 // pred_region
          _
        $region24: #{tpu_custom_call.1} parent=11 // pred_fallthru
          _
        // Predicated region
        $region25: #{tpu_custom_call.1} parent=11 // pred_check
          %p277 = pneg %p128
        $region26: #{tpu_custom_call.1} parent=11 // pred_check_branch
          %279 = sbr.rel (%p277) target = $region28
        $region27: #{tpu_custom_call.1} parent=11 // pred_region
          _
        $region28: #{tpu_custom_call.1} parent=11 // pred_fallthru
          _
        // Predicated region
        $region29: #{tpu_custom_call.1} parent=11 // pred_check
          %p280 = pneg %p149
        $region30: #{tpu_custom_call.1} parent=11 // pred_check_branch
          %282 = sbr.rel (%p280) target = $region32
        $region31: #{tpu_custom_call.1} parent=11 // pred_region
          _
        $region32: #{tpu_custom_call.1} parent=11 // pred_fallthru
          _
      $region12: #{tpu_custom_call.1} parent=5 // pred_fallthru
        _
      %p283 = scmp.lt.s32.totalorder %s18, 2
      // Predicated region
      $region33: #{tpu_custom_call.1} parent=5 // pred_check
        %p284 = pneg %p283
      $region34: #{tpu_custom_call.1} parent=5 // pred_check_branch
        %286 = sbr.rel (%p284) target = $region36
      $region35: #{tpu_custom_call.1} parent=5 // pred_region
        // Predicated region
        $region37: #{tpu_custom_call.1} parent=35 // pred_check
          %p287 = pneg %p38
        $region38: #{tpu_custom_call.1} parent=35 // pred_check_branch
          %289 = sbr.rel (%p287) target = $region40
        $region39: #{tpu_custom_call.1} parent=35 // pred_region
          %p290 = scmp.lt.s32.totalorder %s18, 1
          %s291 = scalar_select %p290, %s18, 1
          %s292 = smul.addr %s291, 8
          %s293 = scalar_lea.vmem %s0, %s292
        $region40: #{tpu_custom_call.1} parent=35 // pred_fallthru
          _
        // Predicated region
        $region41: #{tpu_custom_call.1} parent=35 // pred_check
          %p294 = pneg %p169
        $region42: #{tpu_custom_call.1} parent=35 // pred_check_branch
          %296 = sbr.rel (%p294) target = $region44
        $region43: #{tpu_custom_call.1} parent=35 // pred_region
          %p297 = scmp.lt.s32.totalorder %s18, 1
          %s298 = scalar_select %p297, %s18, 1
          %s299 = smul.addr %s298, 8
          %s300 = scalar_lea.vmem %s6, %s299
        $region44: #{tpu_custom_call.1} parent=35 // pred_fallthru
          _
        // Predicated region
        $region45: #{tpu_custom_call.1} parent=35 // pred_check
          %p301 = pneg %p195
        $region46: #{tpu_custom_call.1} parent=35 // pred_check_branch
          %303 = sbr.rel (%p301) target = $region48
        $region47: #{tpu_custom_call.1} parent=35 // pred_region
          %p304 = scmp.lt.s32.totalorder %s18, 1
          %s305 = scalar_select %p304, %s18, 1
          %s306 = scalar_lea.vmem %s7, %s305
        $region48: #{tpu_custom_call.1} parent=35 // pred_fallthru
          _
        // Predicated region
        $region49: #{tpu_custom_call.1} parent=35 // pred_check
          %p307 = pneg %p221
        $region50: #{tpu_custom_call.1} parent=35 // pred_check_branch
          %309 = sbr.rel (%p307) target = $region52
        $region51: #{tpu_custom_call.1} parent=35 // pred_region
          %p310 = scmp.lt.s32.totalorder %s18, 1
          %s311 = scalar_select %p310, %s18, 1
          %s312 = smul.addr %s311, 8
          %s313 = scalar_lea.vmem %s8, %s312
        $region52: #{tpu_custom_call.1} parent=35 // pred_fallthru
          _
      $region36: #{tpu_custom_call.1} parent=5 // pred_fallthru
        _
      %p314 = scmp.le.s32.totalorder 1, %s18
      %p315 = scmp.lt.s32.totalorder %s18, 3
      %p316 = pnand %p314, %p315
      %p317 = pneg %p316
      // Predicated region
      $region53: #{tpu_custom_call.1} parent=5 // pred_check
        _
      $region54: #{tpu_custom_call.1} parent=5 // pred_check_branch
        %319 = sbr.rel (%p316) target = $region56
      $region55: #{tpu_custom_call.1} parent=5 // pred_region
        %s320 = ssub.s32 %s18, 1
        %p321 = scmp.lt.s32.totalorder %s23, 1
        %s322 = scalar_select %p321, %s23, 1
        %s323 = smul.addr %s322, 8
        %s324 = scalar_lea.vmem %s0, %s323
        %p325 = pneg %p44
        %p326 = pneg %p41
        %p327 = pneg %p65
        %p328 = pneg %p62
        %p329 = pneg %p86
        %p330 = pneg %p83
        %p331 = pneg %p107
        %p332 = pneg %p104
        %p333 = pneg %p128
        %p334 = pneg %p125
        %p335 = pneg %p149
        %p336 = pneg %p146
        %p337 = scmp.lt.s32.totalorder %s23, 1
        %s338 = scalar_select %p337, %s23, 1
        %s339 = smul.addr %s338, 8
        %s340 = scalar_lea.vmem %s6, %s339
        %p341 = pneg %p175
        %p342 = pneg %p172
        %p343 = scmp.lt.s32.totalorder %s23, 1
        %s344 = scalar_select %p343, %s23, 1
        %s345 = scalar_lea.vmem %s7, %s344
        %p346 = pneg %p201
        %p347 = pneg %p198
        %p348 = scmp.lt.s32.totalorder %s23, 1
        %s349 = scalar_select %p348, %s23, 1
        %s350 = smul.addr %s349, 8
        %s351 = scalar_lea.vmem %s8, %s350
        %p352 = pneg %p227
        %p353 = pneg %p224
        %p354 = pneg %p253
        %p355 = pneg %p250
        %s356 = sand.u32 %s240, 1
        %s357 = scalar_lea.sflag [#allocation3], %s356
        %s358 = sand.u32 %s240, 1
        %s359 = smul.addr %s358, 8
        %s360 = scalar_lea.vmem [#allocation2], %s359
        %p361 = scmp.lt.s32.totalorder %s23, 1
        %s362 = scalar_select %p361, %s23, 1
        %s363 = smul.addr %s362, 8
        %s364 = scalar_lea.vmem %s0, %s363
        %p365 = scmp.lt.s32.totalorder %s23, 1
        %s366 = scalar_select %p365, %s23, 1
        %s367 = smul.addr %s366, 8
        %s368 = scalar_lea.vmem %s6, %s367
        %p369 = scmp.lt.s32.totalorder %s23, 1
        %s370 = scalar_select %p369, %s23, 1
        %s371 = scalar_lea.vmem %s7, %s370
        %p372 = scmp.lt.s32.totalorder %s23, 1
        %s373 = scalar_select %p372, %s23, 1
        %s374 = smul.addr %s373, 8
        %s375 = scalar_lea.vmem %s8, %s374
        %v376 = vld [vmem:[%s364] sm:$0xff]
        %v377 = vlaneseq
        %v378 = vand.u32 %v377, 127
        %vm379 = vcmp.lt.s32.totalorder %v378, 78
        %v380 = vsel %vm379, 1, 0
        %v381 = vcvt.s32.f32 %v380
        %382 = vadd.xlane.f32.xlu0 %v376
        %v383 = vpop.xlane.xlu0 %382
        %v384 = vmul.f32 %v383, 0.012820513
        %v385 = vsub.f32 %v376, %v384
        %v386 = vmul.f32 %v385, %v381
        %v387 = vmul.f32 %v386, %v386
        %388 = vadd.xlane.f32.xlu0 %v387
        %v389 = vpop.xlane.xlu0 %388
        %v390 = vmul.f32 %v389, 0.012820513
        %v391 = vadd.f32 %v390, 1e-05
        %v392 = vrsqrt.pop %v391
        %v393 = vmul.f32 %v386, %v392
        %v394 = vld [vmem:[%s4] sm:$0x1]
        %v396 = vlaneseq
        %v397 = vshrl.u32 %v396, 7
        %v398 = vsub.s32 0, %v397
        %v399 = vrot.slane %v394, %v398
        %v401 = vmul.f32 %v393, %v399
        %v402 = vld [vmem:[%s5] sm:$0x1]
        %v404 = vlaneseq
        %v405 = vshrl.u32 %v404, 7
        %v406 = vsub.s32 0, %v405
        %v407 = vrot.slane %v402, %v406
        %v409 = vadd.f32 %v401, %v407
        %v410 = vld [vmem:[%s1] sm:$0xff]
        %v411 = vld [vmem:[%s1 + $0x8] sm:$0xff]
        %v412 = vld [vmem:[%s1 + $0x10] sm:$0xff]
        %v413 = vld [vmem:[%s1 + $0x18] sm:$0xff]
        %v414 = vld [vmem:[%s1 + $0x20] sm:$0xff]
        %v415 = vld [vmem:[%s1 + $0x28] sm:$0xff]
        %v416 = vld [vmem:[%s1 + $0x30] sm:$0xff]
        %v417 = vld [vmem:[%s1 + $0x38] sm:$0xff]
        %v418 = vld [vmem:[%s1 + $0x40] sm:$0xff]
        %v419 = vld [vmem:[%s1 + $0x48] sm:$0xff]
        %v420 = vld [vmem:[%s1 + $0x50] sm:$0xff]
        %v421 = vld [vmem:[%s1 + $0x58] sm:$0xff]
        %v422 = vld [vmem:[%s1 + $0x60] sm:$0xff]
        %v423 = vld [vmem:[%s1 + $0x68] sm:$0xff]
        %v424 = vld [vmem:[%s1 + $0x70] sm:$0xff]
        %v425 = vld [vmem:[%s1 + $0x78] sm:$0xff]
        %v426 = vld [vmem:[%s1 + $0x80] sm:$0xff]
        %v427 = vld [vmem:[%s1 + $0x88] sm:$0xff]
        %v428 = vld [vmem:[%s1 + $0x90] sm:$0xff]
        %v429 = vld [vmem:[%s1 + $0x98] sm:$0xff]
        %v430 = vld [vmem:[%s1 + $0xa0] sm:$0xff]
        %v431 = vld [vmem:[%s1 + $0xa8] sm:$0xff]
        %v432 = vld [vmem:[%s1 + $0xb0] sm:$0xff]
        %v433 = vld [vmem:[%s1 + $0xb8] sm:$0xff]
        %v434 = vld [vmem:[%s1 + $0xc0] sm:$0xff]
        %v435 = vld [vmem:[%s1 + $0xc8] sm:$0xff]
        %v436 = vld [vmem:[%s1 + $0xd0] sm:$0xff]
        %v437 = vld [vmem:[%s1 + $0xd8] sm:$0xff]
        %v438 = vld [vmem:[%s1 + $0xe0] sm:$0xff]
        %v439 = vld [vmem:[%s1 + $0xe8] sm:$0xff]
        %v440 = vld [vmem:[%s1 + $0xf0] sm:$0xff]
        %v441 = vld [vmem:[%s1 + $0xf8] sm:$0xff]
        %442 = vmatprep.subr.mxu0 %v411
        %443 = vmatpush1.msra.mxu0 %v410
        %444 = vmatprep.subr.mxu0 %v413
        %445 = vmatpush1.msra.mxu0 %v412
        %446 = vmatprep.subr.mxu0 %v415
        %447 = vmatpush1.msra.mxu0 %v414
        %448 = vmatprep.subr.mxu0 %v417
        %449 = vmatpush1.msra.mxu0 %v416
        %450 = vmatprep.subr.mxu0 %v419
        %451 = vmatpush1.msra.mxu0 %v418
        %452 = vmatprep.subr.mxu0 %v421
        %453 = vmatpush1.msra.mxu0 %v420
        %454 = vmatprep.subr.mxu0 %v423
        %455 = vmatpush1.msra.mxu0 %v422
        %456 = vmatprep.subr.mxu0 %v425
        %457 = vmatpush1.msra.mxu0 %v424
        %458 = vmatprep.subr.mxu0 %v427
        %459 = vmatpush1.msra.mxu0 %v426
        %460 = vmatprep.subr.mxu0 %v429
        %461 = vmatpush1.msra.mxu0 %v428
        %462 = vmatprep.subr.mxu0 %v431
        %463 = vmatpush1.msra.mxu0 %v430
        %464 = vmatprep.subr.mxu0 %v433
        %465 = vmatpush1.msra.mxu0 %v432
        %466 = vmatprep.subr.mxu0 %v435
        %467 = vmatpush1.msra.mxu0 %v434
        %468 = vmatprep.subr.mxu0 %v437
        %469 = vmatpush1.msra.mxu0 %v436
        %470 = vmatprep.subr.mxu0 %v439
        %471 = vmatpush1.msra.mxu0 %v438
        %472 = vmatprep.subr.mxu0 %v441
        %473 = vmatpush1.msra.mxu0 %v440
        %474 = vmatprep.subr.mxu0 0.0
        %475 = vmatpush1.msra.mxu0 0.0
        %476 = vmatprep.subr.mxu0 0.0
        %477 = vmatpush1.msra.mxu0 0.0
        %478 = vmatprep.subr.mxu0 0.0
        %479 = vmatpush1.msra.mxu0 0.0
        %480 = vmatprep.subr.mxu0 0.0
        %481 = vmatpush1.msra.mxu0 0.0
        %482 = vmatprep.subr.mxu0 0.0
        %483 = vmatpush1.msra.mxu0 0.0
        %484 = vmatprep.subr.mxu0 0.0
        %485 = vmatpush1.msra.mxu0 0.0
        %486 = vmatprep.subr.mxu0 0.0
        %487 = vmatpush1.msra.mxu0 0.0
        %488 = vmatprep.subr.mxu0 0.0
        %489 = vmatpush1.msra.mxu0 0.0
        %490 = vmatprep.subr.mxu0 0.0
        %491 = vmatpush1.msra.mxu0 0.0
        %492 = vmatprep.subr.mxu0 0.0
        %493 = vmatpush1.msra.mxu0 0.0
        %494 = vmatprep.subr.mxu0 0.0
        %495 = vmatpush1.msra.mxu0 0.0
        %496 = vmatprep.subr.mxu0 0.0
        %497 = vmatpush1.msra.mxu0 0.0
        %498 = vmatprep.subr.mxu0 0.0
        %499 = vmatpush1.msra.mxu0 0.0
        %500 = vmatprep.subr.mxu0 0.0
        %501 = vmatpush1.msra.mxu0 0.0
        %502 = vmatprep.subr.mxu0 0.0
        %503 = vmatpush1.msra.mxu0 0.0
        %504 = vmatprep.subr.mxu0 0.0
        %505 = vmatpush1.msra.mxu0 0.0
        %506 = vmatprep.mubr.f32.mxu0 0.0
        %507 = vmatmul.mubr.f32.gmra.mrb[0].mxu0 %v409
        %v508 = vpop.f32.mrb[0].mxu0
        %v509 = vadd.f32 0.0, %v508
        %v510 = vpop.f32.mrb[0].mxu0
        %v511 = vadd.f32 0.0, %v510
        %512 = vdwg.mxu0
        %v513 = vld [vmem:[%s368] sm:$0xff]
        %v514 = vld [vmem:[%s371] sm:$0x1]
        %516 = vset.pattern.permute.xlu0 0
        %517 = vperm.xlu0 %516, %v513
        %v518 = vpop.permute.xlu0 %517
        %v521 = vlaneseq
        %v522 = vshrl.u32 %v521, 7
        %v523 = vsub.s32 0, %v522
        %v524 = vrot.slane %v514, %v523
        %vm526 = vcmp.eq.f32.partialorder %v518, %v524
        %vm527 = vcmp.gt.f32.partialorder %v513, 0.5
        %v528 = vsel %vm527, 1, 0
        %529 = vset.pattern.permute.xlu0 0
        %530 = vperm.xlu0 %529, %v528
        %v531 = vpop.permute.xlu0 %530
        %vm532 = vcmp.eq.s32.totalorder %v531, 1
        %vm533 = vmand %vm526, %vm532
        %v534 = vsel %vm533, 0.0, -1e+30
        %v535 = vcvt.s32.f32 %v528
        %537 = vrot.lane.b32.xlu0 %v509, 50
        %v538 = vpop.permute.xlu0 %537
        %vm539 = vcmask 105472
        %v540 = vsel %vm539, %v509, 0
        %v542 = vsel %vm539, %v538, 0
        %544 = vmatprep.subr.mxu0 0.0
        %545 = vmatpush1.xpose.msra.mxu0 %v542
        %546 = vmatprep.subr.mxu0 0.0
        %547 = vmatpush1.xpose.msra.mxu0 0.0
        %548 = vmatprep.subr.mxu0 0.0
        %549 = vmatpush1.xpose.msra.mxu0 0.0
        %550 = vmatprep.subr.mxu0 0.0
        %551 = vmatpush1.xpose.msra.mxu0 0.0
        %552 = vmatprep.subr.mxu0 0.0
        %553 = vmatpush1.xpose.msra.mxu0 0.0
        %554 = vmatprep.subr.mxu0 0.0
        %555 = vmatpush1.xpose.msra.mxu0 0.0
        %556 = vmatprep.subr.mxu0 0.0
        %557 = vmatpush1.xpose.msra.mxu0 0.0
        %558 = vmatprep.subr.mxu0 0.0
        %559 = vmatpush1.xpose.msra.mxu0 0.0
        %560 = vmatprep.subr.mxu0 0.0
        %561 = vmatpush1.xpose.msra.mxu0 0.0
        %562 = vmatprep.subr.mxu0 0.0
        %563 = vmatpush1.xpose.msra.mxu0 0.0
        %564 = vmatprep.subr.mxu0 0.0
        %565 = vmatpush1.xpose.msra.mxu0 0.0
        %566 = vmatprep.subr.mxu0 0.0
        %567 = vmatpush1.xpose.msra.mxu0 0.0
        %568 = vmatprep.subr.mxu0 0.0
        %569 = vmatpush1.xpose.msra.mxu0 0.0
        %570 = vmatprep.subr.mxu0 0.0
        %571 = vmatpush1.xpose.msra.mxu0 0.0
        %572 = vmatprep.subr.mxu0 0.0
        %573 = vmatpush1.xpose.msra.mxu0 0.0
        %574 = vmatprep.subr.mxu0 0.0
        %575 = vmatpush1.xpose.msra.mxu0 0.0
        %576 = vmatprep.subr.mxu0 0.0
        %577 = vmatpush1.xpose.msra.mxu0 0.0
        %578 = vmatprep.subr.mxu0 0.0
        %579 = vmatpush1.xpose.msra.mxu0 0.0
        %580 = vmatprep.subr.mxu0 0.0
        %581 = vmatpush1.xpose.msra.mxu0 0.0
        %582 = vmatprep.subr.mxu0 0.0
        %583 = vmatpush1.xpose.msra.mxu0 0.0
        %584 = vmatprep.subr.mxu0 0.0
        %585 = vmatpush1.xpose.msra.mxu0 0.0
        %586 = vmatprep.subr.mxu0 0.0
        %587 = vmatpush1.xpose.msra.mxu0 0.0
        %588 = vmatprep.subr.mxu0 0.0
        %589 = vmatpush1.xpose.msra.mxu0 0.0
        %590 = vmatprep.subr.mxu0 0.0
        %591 = vmatpush1.xpose.msra.mxu0 0.0
        %592 = vmatprep.subr.mxu0 0.0
        %593 = vmatpush1.xpose.msra.mxu0 0.0
        %594 = vmatprep.subr.mxu0 0.0
        %595 = vmatpush1.xpose.msra.mxu0 0.0
        %596 = vmatprep.subr.mxu0 0.0
        %597 = vmatpush1.xpose.msra.mxu0 0.0
        %598 = vmatprep.subr.mxu0 0.0
        %599 = vmatpush1.xpose.msra.mxu0 0.0
        %600 = vmatprep.subr.mxu0 0.0
        %601 = vmatpush1.xpose.msra.mxu0 0.0
        %602 = vmatprep.subr.mxu0 0.0
        %603 = vmatpush1.xpose.msra.mxu0 0.0
        %604 = vmatprep.subr.mxu0 0.0
        %605 = vmatpush1.xpose.msra.mxu0 0.0
        %606 = vmatprep.subr.mxu0 0.0
        %607 = vmatpush1.xpose.msra.mxu0 0.0
        %608 = vmatprep.mubr.f32.mxu0 0.0
        %609 = vmatmul.mubr.f32.gmra.mrb[0].mxu0 %v540
        %v610 = vpop.f32.mrb[0].mxu0
        %v611 = vadd.f32 %v534, %v610
        %v612 = vpop.f32.mrb[0].mxu0
        %613 = vdwg.mxu0
        %vm614 = vcmask 64512
        %v615 = vsel %vm614, %v611, -inf
        %616 = vmax.xlane.f32.xlu0 %v615
        %v617 = vpop.xlane.xlu0 %616
        %v618 = vsub.f32 %v611, %v617
        %v619 = vmul.f32 %v618, 1.442695
        %v620 = vpow.pop %v619
        %v621 = vsel %vm614, %v620, 0.0
        %622 = vadd.xlane.f32.xlu0 %v621
        %v623 = vpop.xlane.xlu0 %622
        %v624 = vrcp.pop %v623
        %v625 = vmul.f32 %v620, %v624
        %v626 = vld [vmem:[%s2] sm:$0xff]
        %v627 = vld [vmem:[%s2 + $0x8] sm:$0x1f]
        %629 = vrot.lane.b32.xlu0 %v511, 100
        %v630 = vpop.permute.xlu0 %629
        %v631 = vsel %vm539, %v630, 0
        %vm633 = vcmask 1044480
        %v635 = vsel %vm633, %v627, 0
        %637 = vmatprep.subr.mxu0 0.0
        %638 = vmatpush1.msra.mxu0 %v626
        %639 = vmatprep.subr.mxu0 0.0
        %640 = vmatpush1.msra.mxu0 %v635
        %641 = vmatprep.subr.mxu0 0.0
        %642 = vmatpush1.msra.mxu0 0.0
        %643 = vmatprep.subr.mxu0 0.0
        %644 = vmatpush1.msra.mxu0 0.0
        %645 = vmatprep.subr.mxu0 0.0
        %646 = vmatpush1.msra.mxu0 0.0
        %647 = vmatprep.subr.mxu0 0.0
        %648 = vmatpush1.msra.mxu0 0.0
        %649 = vmatprep.subr.mxu0 0.0
        %650 = vmatpush1.msra.mxu0 0.0
        %651 = vmatprep.subr.mxu0 0.0
        %652 = vmatpush1.msra.mxu0 0.0
        %653 = vmatprep.subr.mxu0 0.0
        %654 = vmatpush1.msra.mxu0 0.0
        %655 = vmatprep.subr.mxu0 0.0
        %656 = vmatpush1.msra.mxu0 0.0
        %657 = vmatprep.subr.mxu0 0.0
        %658 = vmatpush1.msra.mxu0 0.0
        %659 = vmatprep.subr.mxu0 0.0
        %660 = vmatpush1.msra.mxu0 0.0
        %661 = vmatprep.subr.mxu0 0.0
        %662 = vmatpush1.msra.mxu0 0.0
        %663 = vmatprep.subr.mxu0 0.0
        %664 = vmatpush1.msra.mxu0 0.0
        %665 = vmatprep.subr.mxu0 0.0
        %666 = vmatpush1.msra.mxu0 0.0
        %667 = vmatprep.subr.mxu0 0.0
        %668 = vmatpush1.msra.mxu0 0.0
        %669 = vmatprep.subr.mxu0 0.0
        %670 = vmatpush1.msra.mxu0 0.0
        %671 = vmatprep.subr.mxu0 0.0
        %672 = vmatpush1.msra.mxu0 0.0
        %673 = vmatprep.subr.mxu0 0.0
        %674 = vmatpush1.msra.mxu0 0.0
        %675 = vmatprep.subr.mxu0 0.0
        %676 = vmatpush1.msra.mxu0 0.0
        %677 = vmatprep.subr.mxu0 0.0
        %678 = vmatpush1.msra.mxu0 0.0
        %679 = vmatprep.subr.mxu0 0.0
        %680 = vmatpush1.msra.mxu0 0.0
        %681 = vmatprep.subr.mxu0 0.0
        %682 = vmatpush1.msra.mxu0 0.0
        %683 = vmatprep.subr.mxu0 0.0
        %684 = vmatpush1.msra.mxu0 0.0
        %685 = vmatprep.subr.mxu0 0.0
        %686 = vmatpush1.msra.mxu0 0.0
        %687 = vmatprep.subr.mxu0 0.0
        %688 = vmatpush1.msra.mxu0 0.0
        %689 = vmatprep.subr.mxu0 0.0
        %690 = vmatpush1.msra.mxu0 0.0
        %691 = vmatprep.subr.mxu0 0.0
        %692 = vmatpush1.msra.mxu0 0.0
        %693 = vmatprep.subr.mxu0 0.0
        %694 = vmatpush1.msra.mxu0 0.0
        %695 = vmatprep.subr.mxu0 0.0
        %696 = vmatpush1.msra.mxu0 0.0
        %697 = vmatprep.subr.mxu0 0.0
        %698 = vmatpush1.msra.mxu0 0.0
        %699 = vmatprep.subr.mxu0 0.0
        %700 = vmatpush1.msra.mxu0 0.0
        %701 = vmatprep.mubr.f32.mxu0 0.0
        %702 = vmatmul.mubr.f32.gmra.mrb[0].mxu0 %v631
        %v703 = vpop.f32.mrb[0].mxu0
        %v704 = vadd.f32 0.0, %v703
        %v705 = vpop.f32.mrb[0].mxu0
        %706 = vdwg.mxu0
        %v707 = vadd.f32 %v704, 0.0
        %708 = vrot.lane.b32.xlu0 %v509, 115
        %v709 = vpop.permute.xlu0 %708
        %710 = vrot.lane.b32.xlu0 %v509, 37
        %v711 = vpop.permute.xlu0 %710
        %v712 = vsel %vm539, %v709, 0
        %v714 = vsel %vm539, %v711, 0
        %716 = vmatprep.subr.mxu0 0.0
        %717 = vmatpush1.xpose.msra.mxu0 %v714
        %718 = vmatprep.subr.mxu0 0.0
        %719 = vmatpush1.xpose.msra.mxu0 0.0
        %720 = vmatprep.subr.mxu0 0.0
        %721 = vmatpush1.xpose.msra.mxu0 0.0
        %722 = vmatprep.subr.mxu0 0.0
        %723 = vmatpush1.xpose.msra.mxu0 0.0
        %724 = vmatprep.subr.mxu0 0.0
        %725 = vmatpush1.xpose.msra.mxu0 0.0
        %726 = vmatprep.subr.mxu0 0.0
        %727 = vmatpush1.xpose.msra.mxu0 0.0
        %728 = vmatprep.subr.mxu0 0.0
        %729 = vmatpush1.xpose.msra.mxu0 0.0
        %730 = vmatprep.subr.mxu0 0.0
        %731 = vmatpush1.xpose.msra.mxu0 0.0
        %732 = vmatprep.subr.mxu0 0.0
        %733 = vmatpush1.xpose.msra.mxu0 0.0
        %734 = vmatprep.subr.mxu0 0.0
        %735 = vmatpush1.xpose.msra.mxu0 0.0
        %736 = vmatprep.subr.mxu0 0.0
        %737 = vmatpush1.xpose.msra.mxu0 0.0
        %738 = vmatprep.subr.mxu0 0.0
        %739 = vmatpush1.xpose.msra.mxu0 0.0
        %740 = vmatprep.subr.mxu0 0.0
        %741 = vmatpush1.xpose.msra.mxu0 0.0
        %742 = vmatprep.subr.mxu0 0.0
        %743 = vmatpush1.xpose.msra.mxu0 0.0
        %744 = vmatprep.subr.mxu0 0.0
        %745 = vmatpush1.xpose.msra.mxu0 0.0
        %746 = vmatprep.subr.mxu0 0.0
        %747 = vmatpush1.xpose.msra.mxu0 0.0
        %748 = vmatprep.subr.mxu0 0.0
        %749 = vmatpush1.xpose.msra.mxu0 0.0
        %750 = vmatprep.subr.mxu0 0.0
        %751 = vmatpush1.xpose.msra.mxu0 0.0
        %752 = vmatprep.subr.mxu0 0.0
        %753 = vmatpush1.xpose.msra.mxu0 0.0
        %754 = vmatprep.subr.mxu0 0.0
        %755 = vmatpush1.xpose.msra.mxu0 0.0
        %756 = vmatprep.subr.mxu0 0.0
        %757 = vmatpush1.xpose.msra.mxu0 0.0
        %758 = vmatprep.subr.mxu0 0.0
        %759 = vmatpush1.xpose.msra.mxu0 0.0
        %760 = vmatprep.subr.mxu0 0.0
        %761 = vmatpush1.xpose.msra.mxu0 0.0
        %762 = vmatprep.subr.mxu0 0.0
        %763 = vmatpush1.xpose.msra.mxu0 0.0
        %764 = vmatprep.subr.mxu0 0.0
        %765 = vmatpush1.xpose.msra.mxu0 0.0
        %766 = vmatprep.subr.mxu0 0.0
        %767 = vmatpush1.xpose.msra.mxu0 0.0
        %768 = vmatprep.subr.mxu0 0.0
        %769 = vmatpush1.xpose.msra.mxu0 0.0
        %770 = vmatprep.subr.mxu0 0.0
        %771 = vmatpush1.xpose.msra.mxu0 0.0
        %772 = vmatprep.subr.mxu0 0.0
        %773 = vmatpush1.xpose.msra.mxu0 0.0
        %774 = vmatprep.subr.mxu0 0.0
        %775 = vmatpush1.xpose.msra.mxu0 0.0
        %776 = vmatprep.subr.mxu0 0.0
        %777 = vmatpush1.xpose.msra.mxu0 0.0
        %778 = vmatprep.subr.mxu0 0.0
        %779 = vmatpush1.xpose.msra.mxu0 0.0
        %780 = vmatprep.mubr.f32.mxu0 0.0
        %781 = vmatmul.mubr.f32.gmra.mrb[0].mxu0 %v712
        %v782 = vpop.f32.mrb[0].mxu0
        %v783 = vadd.f32 %v534, %v782
        %v784 = vpop.f32.mrb[0].mxu0
        %785 = vdwg.mxu0
        %v786 = vsel %vm614, %v783, -inf
        %787 = vmax.xlane.f32.xlu0 %v786
        %v788 = vpop.xlane.xlu0 %787
        %v789 = vsub.f32 %v783, %v788
        %v790 = vmul.f32 %v789, 1.442695
        %v791 = vpow.pop %v790
        %v792 = vsel %vm614, %v791, 0.0
        %793 = vadd.xlane.f32.xlu0 %v792
        %v794 = vpop.xlane.xlu0 %793
        %v795 = vrcp.pop %v794
        %v796 = vmul.f32 %v791, %v795
        %s797 = scalar_lea.vmem %s2, 16
        %v798 = vld [vmem:[%s797] sm:$0xff]
        %v799 = vld [vmem:[%s797 + $0x8] sm:$0x1f]
        %800 = vrot.lane.b32.xlu0 %v511, 87
        %v801 = vpop.permute.xlu0 %800
        %v802 = vsel %vm539, %v801, 0
        %v805 = vsel %vm633, %v799, 0
        %807 = vmatprep.subr.mxu0 0.0
        %808 = vmatpush1.msra.mxu0 %v798
        %809 = vmatprep.subr.mxu0 0.0
        %810 = vmatpush1.msra.mxu0 %v805
        %811 = vmatprep.subr.mxu0 0.0
        %812 = vmatpush1.msra.mxu0 0.0
        %813 = vmatprep.subr.mxu0 0.0
        %814 = vmatpush1.msra.mxu0 0.0
        %815 = vmatprep.subr.mxu0 0.0
        %816 = vmatpush1.msra.mxu0 0.0
        %817 = vmatprep.subr.mxu0 0.0
        %818 = vmatpush1.msra.mxu0 0.0
        %819 = vmatprep.subr.mxu0 0.0
        %820 = vmatpush1.msra.mxu0 0.0
        %821 = vmatprep.subr.mxu0 0.0
        %822 = vmatpush1.msra.mxu0 0.0
        %823 = vmatprep.subr.mxu0 0.0
        %824 = vmatpush1.msra.mxu0 0.0
        %825 = vmatprep.subr.mxu0 0.0
        %826 = vmatpush1.msra.mxu0 0.0
        %827 = vmatprep.subr.mxu0 0.0
        %828 = vmatpush1.msra.mxu0 0.0
        %829 = vmatprep.subr.mxu0 0.0
        %830 = vmatpush1.msra.mxu0 0.0
        %831 = vmatprep.subr.mxu0 0.0
        %832 = vmatpush1.msra.mxu0 0.0
        %833 = vmatprep.subr.mxu0 0.0
        %834 = vmatpush1.msra.mxu0 0.0
        %835 = vmatprep.subr.mxu0 0.0
        %836 = vmatpush1.msra.mxu0 0.0
        %837 = vmatprep.subr.mxu0 0.0
        %838 = vmatpush1.msra.mxu0 0.0
        %839 = vmatprep.subr.mxu0 0.0
        %840 = vmatpush1.msra.mxu0 0.0
        %841 = vmatprep.subr.mxu0 0.0
        %842 = vmatpush1.msra.mxu0 0.0
        %843 = vmatprep.subr.mxu0 0.0
        %844 = vmatpush1.msra.mxu0 0.0
        %845 = vmatprep.subr.mxu0 0.0
        %846 = vmatpush1.msra.mxu0 0.0
        %847 = vmatprep.subr.mxu0 0.0
        %848 = vmatpush1.msra.mxu0 0.0
        %849 = vmatprep.subr.mxu0 0.0
        %850 = vmatpush1.msra.mxu0 0.0
        %851 = vmatprep.subr.mxu0 0.0
        %852 = vmatpush1.msra.mxu0 0.0
        %853 = vmatprep.subr.mxu0 0.0
        %854 = vmatpush1.msra.mxu0 0.0
        %855 = vmatprep.subr.mxu0 0.0
        %856 = vmatpush1.msra.mxu0 0.0
        %857 = vmatprep.subr.mxu0 0.0
        %858 = vmatpush1.msra.mxu0 0.0
        %859 = vmatprep.subr.mxu0 0.0
        %860 = vmatpush1.msra.mxu0 0.0
        %861 = vmatprep.subr.mxu0 0.0
        %862 = vmatpush1.msra.mxu0 0.0
        %863 = vmatprep.subr.mxu0 0.0
        %864 = vmatpush1.msra.mxu0 0.0
        %865 = vmatprep.subr.mxu0 0.0
        %866 = vmatpush1.msra.mxu0 0.0
        %867 = vmatprep.subr.mxu0 0.0
        %868 = vmatpush1.msra.mxu0 0.0
        %869 = vmatprep.subr.mxu0 0.0
        %870 = vmatpush1.msra.mxu0 0.0
        %871 = vmatprep.mubr.f32.mxu0 0.0
        %872 = vmatmul.mubr.f32.gmra.mrb[0].mxu0 %v802
        %v873 = vpop.f32.mrb[0].mxu0
        %v874 = vadd.f32 0.0, %v873
        %v875 = vpop.f32.mrb[0].mxu0
        %876 = vdwg.mxu0
        %v878 = vsel %vm614, %v796, 0
        %880 = vmatprep.subr.mxu0 0.0
        %881 = vmatpush1.msra.mxu0 %v874
        %882 = vmatprep.subr.mxu0 0.0
        %883 = vmatpush1.msra.mxu0 0.0
        %884 = vmatprep.subr.mxu0 0.0
        %885 = vmatpush1.msra.mxu0 0.0
        %886 = vmatprep.subr.mxu0 0.0
        %887 = vmatpush1.msra.mxu0 0.0
        %888 = vmatprep.subr.mxu0 0.0
        %889 = vmatpush1.msra.mxu0 0.0
        %890 = vmatprep.subr.mxu0 0.0
        %891 = vmatpush1.msra.mxu0 0.0
        %892 = vmatprep.subr.mxu0 0.0
        %893 = vmatpush1.msra.mxu0 0.0
        %894 = vmatprep.subr.mxu0 0.0
        %895 = vmatpush1.msra.mxu0 0.0
        %896 = vmatprep.subr.mxu0 0.0
        %897 = vmatpush1.msra.mxu0 0.0
        %898 = vmatprep.subr.mxu0 0.0
        %899 = vmatpush1.msra.mxu0 0.0
        %900 = vmatprep.subr.mxu0 0.0
        %901 = vmatpush1.msra.mxu0 0.0
        %902 = vmatprep.subr.mxu0 0.0
        %903 = vmatpush1.msra.mxu0 0.0
        %904 = vmatprep.subr.mxu0 0.0
        %905 = vmatpush1.msra.mxu0 0.0
        %906 = vmatprep.subr.mxu0 0.0
        %907 = vmatpush1.msra.mxu0 0.0
        %908 = vmatprep.subr.mxu0 0.0
        %909 = vmatpush1.msra.mxu0 0.0
        %910 = vmatprep.subr.mxu0 0.0
        %911 = vmatpush1.msra.mxu0 0.0
        %912 = vmatprep.subr.mxu0 0.0
        %913 = vmatpush1.msra.mxu0 0.0
        %914 = vmatprep.subr.mxu0 0.0
        %915 = vmatpush1.msra.mxu0 0.0
        %916 = vmatprep.subr.mxu0 0.0
        %917 = vmatpush1.msra.mxu0 0.0
        %918 = vmatprep.subr.mxu0 0.0
        %919 = vmatpush1.msra.mxu0 0.0
        %920 = vmatprep.subr.mxu0 0.0
        %921 = vmatpush1.msra.mxu0 0.0
        %922 = vmatprep.subr.mxu0 0.0
        %923 = vmatpush1.msra.mxu0 0.0
        %924 = vmatprep.subr.mxu0 0.0
        %925 = vmatpush1.msra.mxu0 0.0
        %926 = vmatprep.subr.mxu0 0.0
        %927 = vmatpush1.msra.mxu0 0.0
        %928 = vmatprep.subr.mxu0 0.0
        %929 = vmatpush1.msra.mxu0 0.0
        %930 = vmatprep.subr.mxu0 0.0
        %931 = vmatpush1.msra.mxu0 0.0
        %932 = vmatprep.subr.mxu0 0.0
        %933 = vmatpush1.msra.mxu0 0.0
        %934 = vmatprep.subr.mxu0 0.0
        %935 = vmatpush1.msra.mxu0 0.0
        %936 = vmatprep.subr.mxu0 0.0
        %937 = vmatpush1.msra.mxu0 0.0
        %938 = vmatprep.subr.mxu0 0.0
        %939 = vmatpush1.msra.mxu0 0.0
        %940 = vmatprep.subr.mxu0 0.0
        %941 = vmatpush1.msra.mxu0 0.0
        %942 = vmatprep.subr.mxu0 0.0
        %943 = vmatpush1.msra.mxu0 0.0
        %944 = vmatprep.mubr.f32.mxu0 0.0
        %945 = vmatmul.mubr.f32.gmra.mrb[0].mxu0 %v878
        %v946 = vpop.f32.mrb[0].mxu0
        %v947 = vadd.f32 0.0, %v946
        %v948 = vpop.f32.mrb[0].mxu0
        %949 = vdwg.mxu0
        %v951 = vsel %vm614, %v625, 0
        %953 = vmatprep.subr.mxu0 0.0
        %954 = vmatpush1.msra.mxu0 %v704
        %955 = vmatprep.subr.mxu0 0.0
        %956 = vmatpush1.msra.mxu0 0.0
        %957 = vmatprep.subr.mxu0 0.0
        %958 = vmatpush1.msra.mxu0 0.0
        %959 = vmatprep.subr.mxu0 0.0
        %960 = vmatpush1.msra.mxu0 0.0
        %961 = vmatprep.subr.mxu0 0.0
        %962 = vmatpush1.msra.mxu0 0.0
        %963 = vmatprep.subr.mxu0 0.0
        %964 = vmatpush1.msra.mxu0 0.0
        %965 = vmatprep.subr.mxu0 0.0
        %966 = vmatpush1.msra.mxu0 0.0
        %967 = vmatprep.subr.mxu0 0.0
        %968 = vmatpush1.msra.mxu0 0.0
        %969 = vmatprep.subr.mxu0 0.0
        %970 = vmatpush1.msra.mxu0 0.0
        %971 = vmatprep.subr.mxu0 0.0
        %972 = vmatpush1.msra.mxu0 0.0
        %973 = vmatprep.subr.mxu0 0.0
        %974 = vmatpush1.msra.mxu0 0.0
        %975 = vmatprep.subr.mxu0 0.0
        %976 = vmatpush1.msra.mxu0 0.0
        %977 = vmatprep.subr.mxu0 0.0
        %978 = vmatpush1.msra.mxu0 0.0
        %979 = vmatprep.subr.mxu0 0.0
        %980 = vmatpush1.msra.mxu0 0.0
        %981 = vmatprep.subr.mxu0 0.0
        %982 = vmatpush1.msra.mxu0 0.0
        %983 = vmatprep.subr.mxu0 0.0
        %984 = vmatpush1.msra.mxu0 0.0
        %985 = vmatprep.subr.mxu0 0.0
        %986 = vmatpush1.msra.mxu0 0.0
        %987 = vmatprep.subr.mxu0 0.0
        %988 = vmatpush1.msra.mxu0 0.0
        %989 = vmatprep.subr.mxu0 0.0
        %990 = vmatpush1.msra.mxu0 0.0
        %991 = vmatprep.subr.mxu0 0.0
        %992 = vmatpush1.msra.mxu0 0.0
        %993 = vmatprep.subr.mxu0 0.0
        %994 = vmatpush1.msra.mxu0 0.0
        %995 = vmatprep.subr.mxu0 0.0
        %996 = vmatpush1.msra.mxu0 0.0
        %997 = vmatprep.subr.mxu0 0.0
        %998 = vmatpush1.msra.mxu0 0.0
        %999 = vmatprep.subr.mxu0 0.0
        %1000 = vmatpush1.msra.mxu0 0.0
        %1001 = vmatprep.subr.mxu0 0.0
        %1002 = vmatpush1.msra.mxu0 0.0
        %1003 = vmatprep.subr.mxu0 0.0
        %1004 = vmatpush1.msra.mxu0 0.0
        %1005 = vmatprep.subr.mxu0 0.0
        %1006 = vmatpush1.msra.mxu0 0.0
        %1007 = vmatprep.subr.mxu0 0.0
        %1008 = vmatpush1.msra.mxu0 0.0
        %1009 = vmatprep.subr.mxu0 0.0
        %1010 = vmatpush1.msra.mxu0 0.0
        %1011 = vmatprep.subr.mxu0 0.0
        %1012 = vmatpush1.msra.mxu0 0.0
        %1013 = vmatprep.subr.mxu0 0.0
        %1014 = vmatpush1.msra.mxu0 0.0
        %1015 = vmatprep.subr.mxu0 0.0
        %1016 = vmatpush1.msra.mxu0 0.0
        %1017 = vmatprep.mubr.f32.mxu0 0.0
        %1018 = vmatmul.mubr.f32.gmra.mrb[0].mxu0 %v951
        %v1019 = vpop.f32.mrb[0].mxu0
        %v1020 = vadd.f32 %v947, %v1019
        %v1021 = vpop.f32.mrb[0].mxu0
        %1022 = vdwg.mxu0
        %v1023 = vadd.f32 %v707, %v874
        %1024 = vrot.lane.b32.xlu0 %v509, 102
        %v1025 = vpop.permute.xlu0 %1024
        %1026 = vrot.lane.b32.xlu0 %v509, 24
        %v1027 = vpop.permute.xlu0 %1026
        %v1028 = vsel %vm539, %v1025, 0
        %v1030 = vsel %vm539, %v1027, 0
        %1032 = vmatprep.subr.mxu0 0.0
        %1033 = vmatpush1.xpose.msra.mxu0 %v1030
        %1034 = vmatprep.subr.mxu0 0.0
        %1035 = vmatpush1.xpose.msra.mxu0 0.0
        %1036 = vmatprep.subr.mxu0 0.0
        %1037 = vmatpush1.xpose.msra.mxu0 0.0
        %1038 = vmatprep.subr.mxu0 0.0
        %1039 = vmatpush1.xpose.msra.mxu0 0.0
        %1040 = vmatprep.subr.mxu0 0.0
        %1041 = vmatpush1.xpose.msra.mxu0 0.0
        %1042 = vmatprep.subr.mxu0 0.0
        %1043 = vmatpush1.xpose.msra.mxu0 0.0
        %1044 = vmatprep.subr.mxu0 0.0
        %1045 = vmatpush1.xpose.msra.mxu0 0.0
        %1046 = vmatprep.subr.mxu0 0.0
        %1047 = vmatpush1.xpose.msra.mxu0 0.0
        %1048 = vmatprep.subr.mxu0 0.0
        %1049 = vmatpush1.xpose.msra.mxu0 0.0
        %1050 = vmatprep.subr.mxu0 0.0
        %1051 = vmatpush1.xpose.msra.mxu0 0.0
        %1052 = vmatprep.subr.mxu0 0.0
        %1053 = vmatpush1.xpose.msra.mxu0 0.0
        %1054 = vmatprep.subr.mxu0 0.0
        %1055 = vmatpush1.xpose.msra.mxu0 0.0
        %1056 = vmatprep.subr.mxu0 0.0
        %1057 = vmatpush1.xpose.msra.mxu0 0.0
        %1058 = vmatprep.subr.mxu0 0.0
        %1059 = vmatpush1.xpose.msra.mxu0 0.0
        %1060 = vmatprep.subr.mxu0 0.0
        %1061 = vmatpush1.xpose.msra.mxu0 0.0
        %1062 = vmatprep.subr.mxu0 0.0
        %1063 = vmatpush1.xpose.msra.mxu0 0.0
        %1064 = vmatprep.subr.mxu0 0.0
        %1065 = vmatpush1.xpose.msra.mxu0 0.0
        %1066 = vmatprep.subr.mxu0 0.0
        %1067 = vmatpush1.xpose.msra.mxu0 0.0
        %1068 = vmatprep.subr.mxu0 0.0
        %1069 = vmatpush1.xpose.msra.mxu0 0.0
        %1070 = vmatprep.subr.mxu0 0.0
        %1071 = vmatpush1.xpose.msra.mxu0 0.0
        %1072 = vmatprep.subr.mxu0 0.0
        %1073 = vmatpush1.xpose.msra.mxu0 0.0
        %1074 = vmatprep.subr.mxu0 0.0
        %1075 = vmatpush1.xpose.msra.mxu0 0.0
        %1076 = vmatprep.subr.mxu0 0.0
        %1077 = vmatpush1.xpose.msra.mxu0 0.0
        %1078 = vmatprep.subr.mxu0 0.0
        %1079 = vmatpush1.xpose.msra.mxu0 0.0
        %1080 = vmatprep.subr.mxu0 0.0
        %1081 = vmatpush1.xpose.msra.mxu0 0.0
        %1082 = vmatprep.subr.mxu0 0.0
        %1083 = vmatpush1.xpose.msra.mxu0 0.0
        %1084 = vmatprep.subr.mxu0 0.0
        %1085 = vmatpush1.xpose.msra.mxu0 0.0
        %1086 = vmatprep.subr.mxu0 0.0
        %1087 = vmatpush1.xpose.msra.mxu0 0.0
        %1088 = vmatprep.subr.mxu0 0.0
        %1089 = vmatpush1.xpose.msra.mxu0 0.0
        %1090 = vmatprep.subr.mxu0 0.0
        %1091 = vmatpush1.xpose.msra.mxu0 0.0
        %1092 = vmatprep.subr.mxu0 0.0
        %1093 = vmatpush1.xpose.msra.mxu0 0.0
        %1094 = vmatprep.subr.mxu0 0.0
        %1095 = vmatpush1.xpose.msra.mxu0 0.0
        %1096 = vmatprep.mubr.f32.mxu0 0.0
        %1097 = vmatmul.mubr.f32.gmra.mrb[0].mxu0 %v1028
        %v1098 = vpop.f32.mrb[0].mxu0
        %v1099 = vadd.f32 %v534, %v1098
        %v1100 = vpop.f32.mrb[0].mxu0
        %1101 = vdwg.mxu0
        %v1102 = vsel %vm614, %v1099, -inf
        %1103 = vmax.xlane.f32.xlu0 %v1102
        %v1104 = vpop.xlane.xlu0 %1103
        %v1105 = vsub.f32 %v1099, %v1104
        %v1106 = vmul.f32 %v1105, 1.442695
        %v1107 = vpow.pop %v1106
        %v1108 = vsel %vm614, %v1107, 0.0
        %1109 = vadd.xlane.f32.xlu0 %v1108
        %v1110 = vpop.xlane.xlu0 %1109
        %v1111 = vrcp.pop %v1110
        %v1112 = vmul.f32 %v1107, %v1111
        %s1113 = scalar_lea.vmem %s2, 32
        %v1114 = vld [vmem:[%s1113] sm:$0xff]
        %v1115 = vld [vmem:[%s1113 + $0x8] sm:$0x1f]
        %1116 = vrot.lane.b32.xlu0 %v511, 74
        %v1117 = vpop.permute.xlu0 %1116
        %v1118 = vsel %vm539, %v1117, 0
        %v1121 = vsel %vm633, %v1115, 0
        %1123 = vmatprep.subr.mxu0 0.0
        %1124 = vmatpush1.msra.mxu0 %v1114
        %1125 = vmatprep.subr.mxu0 0.0
        %1126 = vmatpush1.msra.mxu0 %v1121
        %1127 = vmatprep.subr.mxu0 0.0
        %1128 = vmatpush1.msra.mxu0 0.0
        %1129 = vmatprep.subr.mxu0 0.0
        %1130 = vmatpush1.msra.mxu0 0.0
        %1131 = vmatprep.subr.mxu0 0.0
        %1132 = vmatpush1.msra.mxu0 0.0
        %1133 = vmatprep.subr.mxu0 0.0
        %1134 = vmatpush1.msra.mxu0 0.0
        %1135 = vmatprep.subr.mxu0 0.0
        %1136 = vmatpush1.msra.mxu0 0.0
        %1137 = vmatprep.subr.mxu0 0.0
        %1138 = vmatpush1.msra.mxu0 0.0
        %1139 = vmatprep.subr.mxu0 0.0
        %1140 = vmatpush1.msra.mxu0 0.0
        %1141 = vmatprep.subr.mxu0 0.0
        %1142 = vmatpush1.msra.mxu0 0.0
        %1143 = vmatprep.subr.mxu0 0.0
        %1144 = vmatpush1.msra.mxu0 0.0
        %1145 = vmatprep.subr.mxu0 0.0
        %1146 = vmatpush1.msra.mxu0 0.0
        %1147 = vmatprep.subr.mxu0 0.0
        %1148 = vmatpush1.msra.mxu0 0.0
        %1149 = vmatprep.subr.mxu0 0.0
        %1150 = vmatpush1.msra.mxu0 0.0
        %1151 = vmatprep.subr.mxu0 0.0
        %1152 = vmatpush1.msra.mxu0 0.0
        %1153 = vmatprep.subr.mxu0 0.0
        %1154 = vmatpush1.msra.mxu0 0.0
        %1155 = vmatprep.subr.mxu0 0.0
        %1156 = vmatpush1.msra.mxu0 0.0
        %1157 = vmatprep.subr.mxu0 0.0
        %1158 = vmatpush1.msra.mxu0 0.0
        %1159 = vmatprep.subr.mxu0 0.0
        %1160 = vmatpush1.msra.mxu0 0.0
        %1161 = vmatprep.subr.mxu0 0.0
        %1162 = vmatpush1.msra.mxu0 0.0
        %1163 = vmatprep.subr.mxu0 0.0
        %1164 = vmatpush1.msra.mxu0 0.0
        %1165 = vmatprep.subr.mxu0 0.0
        %1166 = vmatpush1.msra.mxu0 0.0
        %1167 = vmatprep.subr.mxu0 0.0
        %1168 = vmatpush1.msra.mxu0 0.0
        %1169 = vmatprep.subr.mxu0 0.0
        %1170 = vmatpush1.msra.mxu0 0.0
        %1171 = vmatprep.subr.mxu0 0.0
        %1172 = vmatpush1.msra.mxu0 0.0
        %1173 = vmatprep.subr.mxu0 0.0
        %1174 = vmatpush1.msra.mxu0 0.0
        %1175 = vmatprep.subr.mxu0 0.0
        %1176 = vmatpush1.msra.mxu0 0.0
        %1177 = vmatprep.subr.mxu0 0.0
        %1178 = vmatpush1.msra.mxu0 0.0
        %1179 = vmatprep.subr.mxu0 0.0
        %1180 = vmatpush1.msra.mxu0 0.0
        %1181 = vmatprep.subr.mxu0 0.0
        %1182 = vmatpush1.msra.mxu0 0.0
        %1183 = vmatprep.subr.mxu0 0.0
        %1184 = vmatpush1.msra.mxu0 0.0
        %1185 = vmatprep.subr.mxu0 0.0
        %1186 = vmatpush1.msra.mxu0 0.0
        %1187 = vmatprep.mubr.f32.mxu0 0.0
        %1188 = vmatmul.mubr.f32.gmra.mrb[0].mxu0 %v1118
        %v1189 = vpop.f32.mrb[0].mxu0
        %v1190 = vadd.f32 0.0, %v1189
        %v1191 = vpop.f32.mrb[0].mxu0
        %1192 = vdwg.mxu0
        %v1194 = vsel %vm614, %v1112, 0
        %1196 = vmatprep.subr.mxu0 0.0
        %1197 = vmatpush1.msra.mxu0 %v1190
        %1198 = vmatprep.subr.mxu0 0.0
        %1199 = vmatpush1.msra.mxu0 0.0
        %1200 = vmatprep.subr.mxu0 0.0
        %1201 = vmatpush1.msra.mxu0 0.0
        %1202 = vmatprep.subr.mxu0 0.0
        %1203 = vmatpush1.msra.mxu0 0.0
        %1204 = vmatprep.subr.mxu0 0.0
        %1205 = vmatpush1.msra.mxu0 0.0
        %1206 = vmatprep.subr.mxu0 0.0
        %1207 = vmatpush1.msra.mxu0 0.0
        %1208 = vmatprep.subr.mxu0 0.0
        %1209 = vmatpush1.msra.mxu0 0.0
        %1210 = vmatprep.subr.mxu0 0.0
        %1211 = vmatpush1.msra.mxu0 0.0
        %1212 = vmatprep.subr.mxu0 0.0
        %1213 = vmatpush1.msra.mxu0 0.0
        %1214 = vmatprep.subr.mxu0 0.0
        %1215 = vmatpush1.msra.mxu0 0.0
        %1216 = vmatprep.subr.mxu0 0.0
        %1217 = vmatpush1.msra.mxu0 0.0
        %1218 = vmatprep.subr.mxu0 0.0
        %1219 = vmatpush1.msra.mxu0 0.0
        %1220 = vmatprep.subr.mxu0 0.0
        %1221 = vmatpush1.msra.mxu0 0.0
        %1222 = vmatprep.subr.mxu0 0.0
        %1223 = vmatpush1.msra.mxu0 0.0
        %1224 = vmatprep.subr.mxu0 0.0
        %1225 = vmatpush1.msra.mxu0 0.0
        %1226 = vmatprep.subr.mxu0 0.0
        %1227 = vmatpush1.msra.mxu0 0.0
        %1228 = vmatprep.subr.mxu0 0.0
        %1229 = vmatpush1.msra.mxu0 0.0
        %1230 = vmatprep.subr.mxu0 0.0
        %1231 = vmatpush1.msra.mxu0 0.0
        %1232 = vmatprep.subr.mxu0 0.0
        %1233 = vmatpush1.msra.mxu0 0.0
        %1234 = vmatprep.subr.mxu0 0.0
        %1235 = vmatpush1.msra.mxu0 0.0
        %1236 = vmatprep.subr.mxu0 0.0
        %1237 = vmatpush1.msra.mxu0 0.0
        %1238 = vmatprep.subr.mxu0 0.0
        %1239 = vmatpush1.msra.mxu0 0.0
        %1240 = vmatprep.subr.mxu0 0.0
        %1241 = vmatpush1.msra.mxu0 0.0
        %1242 = vmatprep.subr.mxu0 0.0
        %1243 = vmatpush1.msra.mxu0 0.0
        %1244 = vmatprep.subr.mxu0 0.0
        %1245 = vmatpush1.msra.mxu0 0.0
        %1246 = vmatprep.subr.mxu0 0.0
        %1247 = vmatpush1.msra.mxu0 0.0
        %1248 = vmatprep.subr.mxu0 0.0
        %1249 = vmatpush1.msra.mxu0 0.0
        %1250 = vmatprep.subr.mxu0 0.0
        %1251 = vmatpush1.msra.mxu0 0.0
        %1252 = vmatprep.subr.mxu0 0.0
        %1253 = vmatpush1.msra.mxu0 0.0
        %1254 = vmatprep.subr.mxu0 0.0
        %1255 = vmatpush1.msra.mxu0 0.0
        %1256 = vmatprep.subr.mxu0 0.0
        %1257 = vmatpush1.msra.mxu0 0.0
        %1258 = vmatprep.subr.mxu0 0.0
        %1259 = vmatpush1.msra.mxu0 0.0
        %1260 = vmatprep.mubr.f32.mxu0 0.0
        %1261 = vmatmul.mubr.f32.gmra.mrb[0].mxu0 %v1194
        %v1262 = vpop.f32.mrb[0].mxu0
        %v1263 = vadd.f32 0.0, %v1262
        %v1264 = vpop.f32.mrb[0].mxu0
        %1265 = vdwg.mxu0
        %v1266 = vadd.f32 %v1020, %v1263
        %v1267 = vadd.f32 %v1023, %v1190
        %1268 = vrot.lane.b32.xlu0 %v509, 89
        %v1269 = vpop.permute.xlu0 %1268
        %1270 = vrot.lane.b32.xlu0 %v509, 11
        %v1271 = vpop.permute.xlu0 %1270
        %1272 = vrot.lane.b32.xlu0 %v511, 11
        %v1273 = vpop.permute.xlu0 %1272
        %vm1274 = vcmask 89088
        %v1275 = vsel %vm1274, %v1271, %v1273
        %v1276 = vsel %vm539, %v1269, 0
        %v1278 = vsel %vm539, %v1275, 0
        %1280 = vmatprep.subr.mxu0 0.0
        %1281 = vmatpush1.xpose.msra.mxu0 %v1278
        %1282 = vmatprep.subr.mxu0 0.0
        %1283 = vmatpush1.xpose.msra.mxu0 0.0
        %1284 = vmatprep.subr.mxu0 0.0
        %1285 = vmatpush1.xpose.msra.mxu0 0.0
        %1286 = vmatprep.subr.mxu0 0.0
        %1287 = vmatpush1.xpose.msra.mxu0 0.0
        %1288 = vmatprep.subr.mxu0 0.0
        %1289 = vmatpush1.xpose.msra.mxu0 0.0
        %1290 = vmatprep.subr.mxu0 0.0
        %1291 = vmatpush1.xpose.msra.mxu0 0.0
        %1292 = vmatprep.subr.mxu0 0.0
        %1293 = vmatpush1.xpose.msra.mxu0 0.0
        %1294 = vmatprep.subr.mxu0 0.0
        %1295 = vmatpush1.xpose.msra.mxu0 0.0
        %1296 = vmatprep.subr.mxu0 0.0
        %1297 = vmatpush1.xpose.msra.mxu0 0.0
        %1298 = vmatprep.subr.mxu0 0.0
        %1299 = vmatpush1.xpose.msra.mxu0 0.0
        %1300 = vmatprep.subr.mxu0 0.0
        %1301 = vmatpush1.xpose.msra.mxu0 0.0
        %1302 = vmatprep.subr.mxu0 0.0
        %1303 = vmatpush1.xpose.msra.mxu0 0.0
        %1304 = vmatprep.subr.mxu0 0.0
        %1305 = vmatpush1.xpose.msra.mxu0 0.0
        %1306 = vmatprep.subr.mxu0 0.0
        %1307 = vmatpush1.xpose.msra.mxu0 0.0
        %1308 = vmatprep.subr.mxu0 0.0
        %1309 = vmatpush1.xpose.msra.mxu0 0.0
        %1310 = vmatprep.subr.mxu0 0.0
        %1311 = vmatpush1.xpose.msra.mxu0 0.0
        %1312 = vmatprep.subr.mxu0 0.0
        %1313 = vmatpush1.xpose.msra.mxu0 0.0
        %1314 = vmatprep.subr.mxu0 0.0
        %1315 = vmatpush1.xpose.msra.mxu0 0.0
        %1316 = vmatprep.subr.mxu0 0.0
        %1317 = vmatpush1.xpose.msra.mxu0 0.0
        %1318 = vmatprep.subr.mxu0 0.0
        %1319 = vmatpush1.xpose.msra.mxu0 0.0
        %1320 = vmatprep.subr.mxu0 0.0
        %1321 = vmatpush1.xpose.msra.mxu0 0.0
        %1322 = vmatprep.subr.mxu0 0.0
        %1323 = vmatpush1.xpose.msra.mxu0 0.0
        %1324 = vmatprep.subr.mxu0 0.0
        %1325 = vmatpush1.xpose.msra.mxu0 0.0
        %1326 = vmatprep.subr.mxu0 0.0
        %1327 = vmatpush1.xpose.msra.mxu0 0.0
        %1328 = vmatprep.subr.mxu0 0.0
        %1329 = vmatpush1.xpose.msra.mxu0 0.0
        %1330 = vmatprep.subr.mxu0 0.0
        %1331 = vmatpush1.xpose.msra.mxu0 0.0
        %1332 = vmatprep.subr.mxu0 0.0
        %1333 = vmatpush1.xpose.msra.mxu0 0.0
        %1334 = vmatprep.subr.mxu0 0.0
        %1335 = vmatpush1.xpose.msra.mxu0 0.0
        %1336 = vmatprep.subr.mxu0 0.0
        %1337 = vmatpush1.xpose.msra.mxu0 0.0
        %1338 = vmatprep.subr.mxu0 0.0
        %1339 = vmatpush1.xpose.msra.mxu0 0.0
        %1340 = vmatprep.subr.mxu0 0.0
        %1341 = vmatpush1.xpose.msra.mxu0 0.0
        %1342 = vmatprep.subr.mxu0 0.0
        %1343 = vmatpush1.xpose.msra.mxu0 0.0
        %1344 = vmatprep.mubr.f32.mxu0 0.0
        %1345 = vmatmul.mubr.f32.gmra.mrb[0].mxu0 %v1276
        %v1346 = vpop.f32.mrb[0].mxu0
        %v1347 = vadd.f32 %v534, %v1346
        %v1348 = vpop.f32.mrb[0].mxu0
        %1349 = vdwg.mxu0
        %v1350 = vsel %vm614, %v1347, -inf
        %1351 = vmax.xlane.f32.xlu0 %v1350
        %v1352 = vpop.xlane.xlu0 %1351
        %v1353 = vsub.f32 %v1347, %v1352
        %v1354 = vmul.f32 %v1353, 1.442695
        %v1355 = vpow.pop %v1354
        %v1356 = vsel %vm614, %v1355, 0.0
        %1357 = vadd.xlane.f32.xlu0 %v1356
        %v1358 = vpop.xlane.xlu0 %1357
        %v1359 = vrcp.pop %v1358
        %v1360 = vmul.f32 %v1355, %v1359
        %s1361 = scalar_lea.vmem %s2, 48
        %v1362 = vld [vmem:[%s1361] sm:$0xff]
        %v1363 = vld [vmem:[%s1361 + $0x8] sm:$0x1f]
        %1364 = vrot.lane.b32.xlu0 %v511, 61
        %v1365 = vpop.permute.xlu0 %1364
        %v1366 = vsel %vm539, %v1365, 0
        %v1369 = vsel %vm633, %v1363, 0
        %1371 = vmatprep.subr.mxu0 0.0
        %1372 = vmatpush1.msra.mxu0 %v1362
        %1373 = vmatprep.subr.mxu0 0.0
        %1374 = vmatpush1.msra.mxu0 %v1369
        %1375 = vmatprep.subr.mxu0 0.0
        %1376 = vmatpush1.msra.mxu0 0.0
        %1377 = vmatprep.subr.mxu0 0.0
        %1378 = vmatpush1.msra.mxu0 0.0
        %1379 = vmatprep.subr.mxu0 0.0
        %1380 = vmatpush1.msra.mxu0 0.0
        %1381 = vmatprep.subr.mxu0 0.0
        %1382 = vmatpush1.msra.mxu0 0.0
        %1383 = vmatprep.subr.mxu0 0.0
        %1384 = vmatpush1.msra.mxu0 0.0
        %1385 = vmatprep.subr.mxu0 0.0
        %1386 = vmatpush1.msra.mxu0 0.0
        %1387 = vmatprep.subr.mxu0 0.0
        %1388 = vmatpush1.msra.mxu0 0.0
        %1389 = vmatprep.subr.mxu0 0.0
        %1390 = vmatpush1.msra.mxu0 0.0
        %1391 = vmatprep.subr.mxu0 0.0
        %1392 = vmatpush1.msra.mxu0 0.0
        %1393 = vmatprep.subr.mxu0 0.0
        %1394 = vmatpush1.msra.mxu0 0.0
        %1395 = vmatprep.subr.mxu0 0.0
        %1396 = vmatpush1.msra.mxu0 0.0
        %1397 = vmatprep.subr.mxu0 0.0
        %1398 = vmatpush1.msra.mxu0 0.0
        %1399 = vmatprep.subr.mxu0 0.0
        %1400 = vmatpush1.msra.mxu0 0.0
        %1401 = vmatprep.subr.mxu0 0.0
        %1402 = vmatpush1.msra.mxu0 0.0
        %1403 = vmatprep.subr.mxu0 0.0
        %1404 = vmatpush1.msra.mxu0 0.0
        %1405 = vmatprep.subr.mxu0 0.0
        %1406 = vmatpush1.msra.mxu0 0.0
        %1407 = vmatprep.subr.mxu0 0.0
        %1408 = vmatpush1.msra.mxu0 0.0
        %1409 = vmatprep.subr.mxu0 0.0
        %1410 = vmatpush1.msra.mxu0 0.0
        %1411 = vmatprep.subr.mxu0 0.0
        %1412 = vmatpush1.msra.mxu0 0.0
        %1413 = vmatprep.subr.mxu0 0.0
        %1414 = vmatpush1.msra.mxu0 0.0
        %1415 = vmatprep.subr.mxu0 0.0
        %1416 = vmatpush1.msra.mxu0 0.0
        %1417 = vmatprep.subr.mxu0 0.0
        %1418 = vmatpush1.msra.mxu0 0.0
        %1419 = vmatprep.subr.mxu0 0.0
        %1420 = vmatpush1.msra.mxu0 0.0
        %1421 = vmatprep.subr.mxu0 0.0
        %1422 = vmatpush1.msra.mxu0 0.0
        %1423 = vmatprep.subr.mxu0 0.0
        %1424 = vmatpush1.msra.mxu0 0.0
        %1425 = vmatprep.subr.mxu0 0.0
        %1426 = vmatpush1.msra.mxu0 0.0
        %1427 = vmatprep.subr.mxu0 0.0
        %1428 = vmatpush1.msra.mxu0 0.0
        %1429 = vmatprep.subr.mxu0 0.0
        %1430 = vmatpush1.msra.mxu0 0.0
        %1431 = vmatprep.subr.mxu0 0.0
        %1432 = vmatpush1.msra.mxu0 0.0
        %1433 = vmatprep.subr.mxu0 0.0
        %1434 = vmatpush1.msra.mxu0 0.0
        %1435 = vmatprep.mubr.f32.mxu0 0.0
        %1436 = vmatmul.mubr.f32.gmra.mrb[0].mxu0 %v1366
        %v1437 = vpop.f32.mrb[0].mxu0
        %v1438 = vadd.f32 0.0, %v1437
        %v1439 = vpop.f32.mrb[0].mxu0
        %1440 = vdwg.mxu0
        %v1442 = vsel %vm614, %v1360, 0
        %1444 = vmatprep.subr.mxu0 0.0
        %1445 = vmatpush1.msra.mxu0 %v1438
        %1446 = vmatprep.subr.mxu0 0.0
        %1447 = vmatpush1.msra.mxu0 0.0
        %1448 = vmatprep.subr.mxu0 0.0
        %1449 = vmatpush1.msra.mxu0 0.0
        %1450 = vmatprep.subr.mxu0 0.0
        %1451 = vmatpush1.msra.mxu0 0.0
        %1452 = vmatprep.subr.mxu0 0.0
        %1453 = vmatpush1.msra.mxu0 0.0
        %1454 = vmatprep.subr.mxu0 0.0
        %1455 = vmatpush1.msra.mxu0 0.0
        %1456 = vmatprep.subr.mxu0 0.0
        %1457 = vmatpush1.msra.mxu0 0.0
        %1458 = vmatprep.subr.mxu0 0.0
        %1459 = vmatpush1.msra.mxu0 0.0
        %1460 = vmatprep.subr.mxu0 0.0
        %1461 = vmatpush1.msra.mxu0 0.0
        %1462 = vmatprep.subr.mxu0 0.0
        %1463 = vmatpush1.msra.mxu0 0.0
        %1464 = vmatprep.subr.mxu0 0.0
        %1465 = vmatpush1.msra.mxu0 0.0
        %1466 = vmatprep.subr.mxu0 0.0
        %1467 = vmatpush1.msra.mxu0 0.0
        %1468 = vmatprep.subr.mxu0 0.0
        %1469 = vmatpush1.msra.mxu0 0.0
        %1470 = vmatprep.subr.mxu0 0.0
        %1471 = vmatpush1.msra.mxu0 0.0
        %1472 = vmatprep.subr.mxu0 0.0
        %1473 = vmatpush1.msra.mxu0 0.0
        %1474 = vmatprep.subr.mxu0 0.0
        %1475 = vmatpush1.msra.mxu0 0.0
        %1476 = vmatprep.subr.mxu0 0.0
        %1477 = vmatpush1.msra.mxu0 0.0
        %1478 = vmatprep.subr.mxu0 0.0
        %1479 = vmatpush1.msra.mxu0 0.0
        %1480 = vmatprep.subr.mxu0 0.0
        %1481 = vmatpush1.msra.mxu0 0.0
        %1482 = vmatprep.subr.mxu0 0.0
        %1483 = vmatpush1.msra.mxu0 0.0
        %1484 = vmatprep.subr.mxu0 0.0
        %1485 = vmatpush1.msra.mxu0 0.0
        %1486 = vmatprep.subr.mxu0 0.0
        %1487 = vmatpush1.msra.mxu0 0.0
        %1488 = vmatprep.subr.mxu0 0.0
        %1489 = vmatpush1.msra.mxu0 0.0
        %1490 = vmatprep.subr.mxu0 0.0
        %1491 = vmatpush1.msra.mxu0 0.0
        %1492 = vmatprep.subr.mxu0 0.0
        %1493 = vmatpush1.msra.mxu0 0.0
        %1494 = vmatprep.subr.mxu0 0.0
        %1495 = vmatpush1.msra.mxu0 0.0
        %1496 = vmatprep.subr.mxu0 0.0
        %1497 = vmatpush1.msra.mxu0 0.0
        %1498 = vmatprep.subr.mxu0 0.0
        %1499 = vmatpush1.msra.mxu0 0.0
        %1500 = vmatprep.subr.mxu0 0.0
        %1501 = vmatpush1.msra.mxu0 0.0
        %1502 = vmatprep.subr.mxu0 0.0
        %1503 = vmatpush1.msra.mxu0 0.0
        %1504 = vmatprep.subr.mxu0 0.0
        %1505 = vmatpush1.msra.mxu0 0.0
        %1506 = vmatprep.subr.mxu0 0.0
        %1507 = vmatpush1.msra.mxu0 0.0
        %1508 = vmatprep.mubr.f32.mxu0 0.0
        %1509 = vmatmul.mubr.f32.gmra.mrb[0].mxu0 %v1442
        %v1510 = vpop.f32.mrb[0].mxu0
        %v1511 = vadd.f32 0.0, %v1510
        %v1512 = vpop.f32.mrb[0].mxu0
        %1513 = vdwg.mxu0
        %v1514 = vadd.f32 %v1266, %v1511
        %v1515 = vadd.f32 %v1267, %v1438
        %1516 = vrot.lane.b32.xlu0 %v509, 76
        %v1517 = vpop.permute.xlu0 %1516
        %1518 = vrot.lane.b32.xlu0 %v511, 126
        %v1519 = vpop.permute.xlu0 %1518
        %v1520 = vsel %vm539, %v1517, 0
        %v1522 = vsel %vm539, %v1519, 0
        %1524 = vmatprep.subr.mxu0 0.0
        %1525 = vmatpush1.xpose.msra.mxu0 %v1522
        %1526 = vmatprep.subr.mxu0 0.0
        %1527 = vmatpush1.xpose.msra.mxu0 0.0
        %1528 = vmatprep.subr.mxu0 0.0
        %1529 = vmatpush1.xpose.msra.mxu0 0.0
        %1530 = vmatprep.subr.mxu0 0.0
        %1531 = vmatpush1.xpose.msra.mxu0 0.0
        %1532 = vmatprep.subr.mxu0 0.0
        %1533 = vmatpush1.xpose.msra.mxu0 0.0
        %1534 = vmatprep.subr.mxu0 0.0
        %1535 = vmatpush1.xpose.msra.mxu0 0.0
        %1536 = vmatprep.subr.mxu0 0.0
        %1537 = vmatpush1.xpose.msra.mxu0 0.0
        %1538 = vmatprep.subr.mxu0 0.0
        %1539 = vmatpush1.xpose.msra.mxu0 0.0
        %1540 = vmatprep.subr.mxu0 0.0
        %1541 = vmatpush1.xpose.msra.mxu0 0.0
        %1542 = vmatprep.subr.mxu0 0.0
        %1543 = vmatpush1.xpose.msra.mxu0 0.0
        %1544 = vmatprep.subr.mxu0 0.0
        %1545 = vmatpush1.xpose.msra.mxu0 0.0
        %1546 = vmatprep.subr.mxu0 0.0
        %1547 = vmatpush1.xpose.msra.mxu0 0.0
        %1548 = vmatprep.subr.mxu0 0.0
        %1549 = vmatpush1.xpose.msra.mxu0 0.0
        %1550 = vmatprep.subr.mxu0 0.0
        %1551 = vmatpush1.xpose.msra.mxu0 0.0
        %1552 = vmatprep.subr.mxu0 0.0
        %1553 = vmatpush1.xpose.msra.mxu0 0.0
        %1554 = vmatprep.subr.mxu0 0.0
        %1555 = vmatpush1.xpose.msra.mxu0 0.0
        %1556 = vmatprep.subr.mxu0 0.0
        %1557 = vmatpush1.xpose.msra.mxu0 0.0
        %1558 = vmatprep.subr.mxu0 0.0
        %1559 = vmatpush1.xpose.msra.mxu0 0.0
        %1560 = vmatprep.subr.mxu0 0.0
        %1561 = vmatpush1.xpose.msra.mxu0 0.0
        %1562 = vmatprep.subr.mxu0 0.0
        %1563 = vmatpush1.xpose.msra.mxu0 0.0
        %1564 = vmatprep.subr.mxu0 0.0
        %1565 = vmatpush1.xpose.msra.mxu0 0.0
        %1566 = vmatprep.subr.mxu0 0.0
        %1567 = vmatpush1.xpose.msra.mxu0 0.0
        %1568 = vmatprep.subr.mxu0 0.0
        %1569 = vmatpush1.xpose.msra.mxu0 0.0
        %1570 = vmatprep.subr.mxu0 0.0
        %1571 = vmatpush1.xpose.msra.mxu0 0.0
        %1572 = vmatprep.subr.mxu0 0.0
        %1573 = vmatpush1.xpose.msra.mxu0 0.0
        %1574 = vmatprep.subr.mxu0 0.0
        %1575 = vmatpush1.xpose.msra.mxu0 0.0
        %1576 = vmatprep.subr.mxu0 0.0
        %1577 = vmatpush1.xpose.msra.mxu0 0.0
        %1578 = vmatprep.subr.mxu0 0.0
        %1579 = vmatpush1.xpose.msra.mxu0 0.0
        %1580 = vmatprep.subr.mxu0 0.0
        %1581 = vmatpush1.xpose.msra.mxu0 0.0
        %1582 = vmatprep.subr.mxu0 0.0
        %1583 = vmatpush1.xpose.msra.mxu0 0.0
        %1584 = vmatprep.subr.mxu0 0.0
        %1585 = vmatpush1.xpose.msra.mxu0 0.0
        %1586 = vmatprep.subr.mxu0 0.0
        %1587 = vmatpush1.xpose.msra.mxu0 0.0
        %1588 = vmatprep.mubr.f32.mxu0 0.0
        %1589 = vmatmul.mubr.f32.gmra.mrb[0].mxu0 %v1520
        %v1590 = vpop.f32.mrb[0].mxu0
        %v1591 = vadd.f32 %v534, %v1590
        %v1592 = vpop.f32.mrb[0].mxu0
        %1593 = vdwg.mxu0
        %v1594 = vsel %vm614, %v1591, -inf
        %1595 = vmax.xlane.f32.xlu0 %v1594
        %v1596 = vpop.xlane.xlu0 %1595
        %v1597 = vsub.f32 %v1591, %v1596
        %v1598 = vmul.f32 %v1597, 1.442695
        %v1599 = vpow.pop %v1598
        %v1600 = vsel %vm614, %v1599, 0.0
        %1601 = vadd.xlane.f32.xlu0 %v1600
        %v1602 = vpop.xlane.xlu0 %1601
        %v1603 = vrcp.pop %v1602
        %v1604 = vmul.f32 %v1599, %v1603
        %s1605 = scalar_lea.vmem %s2, 64
        %v1606 = vld [vmem:[%s1605] sm:$0xff]
        %v1607 = vld [vmem:[%s1605 + $0x8] sm:$0x1f]
        %1608 = vrot.lane.b32.xlu0 %v511, 48
        %v1609 = vpop.permute.xlu0 %1608
        %v1610 = vsel %vm539, %v1609, 0
        %v1613 = vsel %vm633, %v1607, 0
        %1615 = vmatprep.subr.mxu0 0.0
        %1616 = vmatpush1.msra.mxu0 %v1606
        %1617 = vmatprep.subr.mxu0 0.0
        %1618 = vmatpush1.msra.mxu0 %v1613
        %1619 = vmatprep.subr.mxu0 0.0
        %1620 = vmatpush1.msra.mxu0 0.0
        %1621 = vmatprep.subr.mxu0 0.0
        %1622 = vmatpush1.msra.mxu0 0.0
        %1623 = vmatprep.subr.mxu0 0.0
        %1624 = vmatpush1.msra.mxu0 0.0
        %1625 = vmatprep.subr.mxu0 0.0
        %1626 = vmatpush1.msra.mxu0 0.0
        %1627 = vmatprep.subr.mxu0 0.0
        %1628 = vmatpush1.msra.mxu0 0.0
        %1629 = vmatprep.subr.mxu0 0.0
        %1630 = vmatpush1.msra.mxu0 0.0
        %1631 = vmatprep.subr.mxu0 0.0
        %1632 = vmatpush1.msra.mxu0 0.0
        %1633 = vmatprep.subr.mxu0 0.0
        %1634 = vmatpush1.msra.mxu0 0.0
        %1635 = vmatprep.subr.mxu0 0.0
        %1636 = vmatpush1.msra.mxu0 0.0
        %1637 = vmatprep.subr.mxu0 0.0
        %1638 = vmatpush1.msra.mxu0 0.0
        %1639 = vmatprep.subr.mxu0 0.0
        %1640 = vmatpush1.msra.mxu0 0.0
        %1641 = vmatprep.subr.mxu0 0.0
        %1642 = vmatpush1.msra.mxu0 0.0
        %1643 = vmatprep.subr.mxu0 0.0
        %1644 = vmatpush1.msra.mxu0 0.0
        %1645 = vmatprep.subr.mxu0 0.0
        %1646 = vmatpush1.msra.mxu0 0.0
        %1647 = vmatprep.subr.mxu0 0.0
        %1648 = vmatpush1.msra.mxu0 0.0
        %1649 = vmatprep.subr.mxu0 0.0
        %1650 = vmatpush1.msra.mxu0 0.0
        %1651 = vmatprep.subr.mxu0 0.0
        %1652 = vmatpush1.msra.mxu0 0.0
        %1653 = vmatprep.subr.mxu0 0.0
        %1654 = vmatpush1.msra.mxu0 0.0
        %1655 = vmatprep.subr.mxu0 0.0
        %1656 = vmatpush1.msra.mxu0 0.0
        %1657 = vmatprep.subr.mxu0 0.0
        %1658 = vmatpush1.msra.mxu0 0.0
        %1659 = vmatprep.subr.mxu0 0.0
        %1660 = vmatpush1.msra.mxu0 0.0
        %1661 = vmatprep.subr.mxu0 0.0
        %1662 = vmatpush1.msra.mxu0 0.0
        %1663 = vmatprep.subr.mxu0 0.0
        %1664 = vmatpush1.msra.mxu0 0.0
        %1665 = vmatprep.subr.mxu0 0.0
        %1666 = vmatpush1.msra.mxu0 0.0
        %1667 = vmatprep.subr.mxu0 0.0
        %1668 = vmatpush1.msra.mxu0 0.0
        %1669 = vmatprep.subr.mxu0 0.0
        %1670 = vmatpush1.msra.mxu0 0.0
        %1671 = vmatprep.subr.mxu0 0.0
        %1672 = vmatpush1.msra.mxu0 0.0
        %1673 = vmatprep.subr.mxu0 0.0
        %1674 = vmatpush1.msra.mxu0 0.0
        %1675 = vmatprep.subr.mxu0 0.0
        %1676 = vmatpush1.msra.mxu0 0.0
        %1677 = vmatprep.subr.mxu0 0.0
        %1678 = vmatpush1.msra.mxu0 0.0
        %1679 = vmatprep.mubr.f32.mxu0 0.0
        %1680 = vmatmul.mubr.f32.gmra.mrb[0].mxu0 %v1610
        %v1681 = vpop.f32.mrb[0].mxu0
        %v1682 = vadd.f32 0.0, %v1681
        %v1683 = vpop.f32.mrb[0].mxu0
        %1684 = vdwg.mxu0
        %v1686 = vsel %vm614, %v1604, 0
        %1688 = vmatprep.subr.mxu0 0.0
        %1689 = vmatpush1.msra.mxu0 %v1682
        %1690 = vmatprep.subr.mxu0 0.0
        %1691 = vmatpush1.msra.mxu0 0.0
        %1692 = vmatprep.subr.mxu0 0.0
        %1693 = vmatpush1.msra.mxu0 0.0
        %1694 = vmatprep.subr.mxu0 0.0
        %1695 = vmatpush1.msra.mxu0 0.0
        %1696 = vmatprep.subr.mxu0 0.0
        %1697 = vmatpush1.msra.mxu0 0.0
        %1698 = vmatprep.subr.mxu0 0.0
        %1699 = vmatpush1.msra.mxu0 0.0
        %1700 = vmatprep.subr.mxu0 0.0
        %1701 = vmatpush1.msra.mxu0 0.0
        %1702 = vmatprep.subr.mxu0 0.0
        %1703 = vmatpush1.msra.mxu0 0.0
        %1704 = vmatprep.subr.mxu0 0.0
        %1705 = vmatpush1.msra.mxu0 0.0
        %1706 = vmatprep.subr.mxu0 0.0
        %1707 = vmatpush1.msra.mxu0 0.0
        %1708 = vmatprep.subr.mxu0 0.0
        %1709 = vmatpush1.msra.mxu0 0.0
        %1710 = vmatprep.subr.mxu0 0.0
        %1711 = vmatpush1.msra.mxu0 0.0
        %1712 = vmatprep.subr.mxu0 0.0
        %1713 = vmatpush1.msra.mxu0 0.0
        %1714 = vmatprep.subr.mxu0 0.0
        %1715 = vmatpush1.msra.mxu0 0.0
        %1716 = vmatprep.subr.mxu0 0.0
        %1717 = vmatpush1.msra.mxu0 0.0
        %1718 = vmatprep.subr.mxu0 0.0
        %1719 = vmatpush1.msra.mxu0 0.0
        %1720 = vmatprep.subr.mxu0 0.0
        %1721 = vmatpush1.msra.mxu0 0.0
        %1722 = vmatprep.subr.mxu0 0.0
        %1723 = vmatpush1.msra.mxu0 0.0
        %1724 = vmatprep.subr.mxu0 0.0
        %1725 = vmatpush1.msra.mxu0 0.0
        %1726 = vmatprep.subr.mxu0 0.0
        %1727 = vmatpush1.msra.mxu0 0.0
        %1728 = vmatprep.subr.mxu0 0.0
        %1729 = vmatpush1.msra.mxu0 0.0
        %1730 = vmatprep.subr.mxu0 0.0
        %1731 = vmatpush1.msra.mxu0 0.0
        %1732 = vmatprep.subr.mxu0 0.0
        %1733 = vmatpush1.msra.mxu0 0.0
        %1734 = vmatprep.subr.mxu0 0.0
        %1735 = vmatpush1.msra.mxu0 0.0
        %1736 = vmatprep.subr.mxu0 0.0
        %1737 = vmatpush1.msra.mxu0 0.0
        %1738 = vmatprep.subr.mxu0 0.0
        %1739 = vmatpush1.msra.mxu0 0.0
        %1740 = vmatprep.subr.mxu0 0.0
        %1741 = vmatpush1.msra.mxu0 0.0
        %1742 = vmatprep.subr.mxu0 0.0
        %1743 = vmatpush1.msra.mxu0 0.0
        %1744 = vmatprep.subr.mxu0 0.0
        %1745 = vmatpush1.msra.mxu0 0.0
        %1746 = vmatprep.subr.mxu0 0.0
        %1747 = vmatpush1.msra.mxu0 0.0
        %1748 = vmatprep.subr.mxu0 0.0
        %1749 = vmatpush1.msra.mxu0 0.0
        %1750 = vmatprep.subr.mxu0 0.0
        %1751 = vmatpush1.msra.mxu0 0.0
        %1752 = vmatprep.mubr.f32.mxu0 0.0
        %1753 = vmatmul.mubr.f32.gmra.mrb[0].mxu0 %v1686
        %v1754 = vpop.f32.mrb[0].mxu0
        %v1755 = vadd.f32 0.0, %v1754
        %v1756 = vpop.f32.mrb[0].mxu0
        %1757 = vdwg.mxu0
        %v1758 = vadd.f32 %v1514, %v1755
        %v1759 = vadd.f32 %v1515, %v1682
        %1760 = vrot.lane.b32.xlu0 %v509, 63
        %v1761 = vpop.permute.xlu0 %1760
        %1762 = vrot.lane.b32.xlu0 %v511, 113
        %v1763 = vpop.permute.xlu0 %1762
        %v1764 = vsel %vm539, %v1761, 0
        %v1766 = vsel %vm539, %v1763, 0
        %1768 = vmatprep.subr.mxu0 0.0
        %1769 = vmatpush1.xpose.msra.mxu0 %v1766
        %1770 = vmatprep.subr.mxu0 0.0
        %1771 = vmatpush1.xpose.msra.mxu0 0.0
        %1772 = vmatprep.subr.mxu0 0.0
        %1773 = vmatpush1.xpose.msra.mxu0 0.0
        %1774 = vmatprep.subr.mxu0 0.0
        %1775 = vmatpush1.xpose.msra.mxu0 0.0
        %1776 = vmatprep.subr.mxu0 0.0
        %1777 = vmatpush1.xpose.msra.mxu0 0.0
        %1778 = vmatprep.subr.mxu0 0.0
        %1779 = vmatpush1.xpose.msra.mxu0 0.0
        %1780 = vmatprep.subr.mxu0 0.0
        %1781 = vmatpush1.xpose.msra.mxu0 0.0
        %1782 = vmatprep.subr.mxu0 0.0
        %1783 = vmatpush1.xpose.msra.mxu0 0.0
        %1784 = vmatprep.subr.mxu0 0.0
        %1785 = vmatpush1.xpose.msra.mxu0 0.0
        %1786 = vmatprep.subr.mxu0 0.0
        %1787 = vmatpush1.xpose.msra.mxu0 0.0
        %1788 = vmatprep.subr.mxu0 0.0
        %1789 = vmatpush1.xpose.msra.mxu0 0.0
        %1790 = vmatprep.subr.mxu0 0.0
        %1791 = vmatpush1.xpose.msra.mxu0 0.0
        %1792 = vmatprep.subr.mxu0 0.0
        %1793 = vmatpush1.xpose.msra.mxu0 0.0
        %1794 = vmatprep.subr.mxu0 0.0
        %1795 = vmatpush1.xpose.msra.mxu0 0.0
        %1796 = vmatprep.subr.mxu0 0.0
        %1797 = vmatpush1.xpose.msra.mxu0 0.0
        %1798 = vmatprep.subr.mxu0 0.0
        %1799 = vmatpush1.xpose.msra.mxu0 0.0
        %1800 = vmatprep.subr.mxu0 0.0
        %1801 = vmatpush1.xpose.msra.mxu0 0.0
        %1802 = vmatprep.subr.mxu0 0.0
        %1803 = vmatpush1.xpose.msra.mxu0 0.0
        %1804 = vmatprep.subr.mxu0 0.0
        %1805 = vmatpush1.xpose.msra.mxu0 0.0
        %1806 = vmatprep.subr.mxu0 0.0
        %1807 = vmatpush1.xpose.msra.mxu0 0.0
        %1808 = vmatprep.subr.mxu0 0.0
        %1809 = vmatpush1.xpose.msra.mxu0 0.0
        %1810 = vmatprep.subr.mxu0 0.0
        %1811 = vmatpush1.xpose.msra.mxu0 0.0
        %1812 = vmatprep.subr.mxu0 0.0
        %1813 = vmatpush1.xpose.msra.mxu0 0.0
        %1814 = vmatprep.subr.mxu0 0.0
        %1815 = vmatpush1.xpose.msra.mxu0 0.0
        %1816 = vmatprep.subr.mxu0 0.0
        %1817 = vmatpush1.xpose.msra.mxu0 0.0
        %1818 = vmatprep.subr.mxu0 0.0
        %1819 = vmatpush1.xpose.msra.mxu0 0.0
        %1820 = vmatprep.subr.mxu0 0.0
        %1821 = vmatpush1.xpose.msra.mxu0 0.0
        %1822 = vmatprep.subr.mxu0 0.0
        %1823 = vmatpush1.xpose.msra.mxu0 0.0
        %1824 = vmatprep.subr.mxu0 0.0
        %1825 = vmatpush1.xpose.msra.mxu0 0.0
        %1826 = vmatprep.subr.mxu0 0.0
        %1827 = vmatpush1.xpose.msra.mxu0 0.0
        %1828 = vmatprep.subr.mxu0 0.0
        %1829 = vmatpush1.xpose.msra.mxu0 0.0
        %1830 = vmatprep.subr.mxu0 0.0
        %1831 = vmatpush1.xpose.msra.mxu0 0.0
        %1832 = vmatprep.mubr.f32.mxu0 0.0
        %1833 = vmatmul.mubr.f32.gmra.mrb[0].mxu0 %v1764
        %v1834 = vpop.f32.mrb[0].mxu0
        %v1835 = vadd.f32 %v534, %v1834
        %v1836 = vpop.f32.mrb[0].mxu0
        %1837 = vdwg.mxu0
        %v1838 = vsel %vm614, %v1835, -inf
        %1839 = vmax.xlane.f32.xlu0 %v1838
        %v1840 = vpop.xlane.xlu0 %1839
        %v1841 = vsub.f32 %v1835, %v1840
        %v1842 = vmul.f32 %v1841, 1.442695
        %v1843 = vpow.pop %v1842
        %v1844 = vsel %vm614, %v1843, 0.0
        %1845 = vadd.xlane.f32.xlu0 %v1844
        %v1846 = vpop.xlane.xlu0 %1845
        %v1847 = vrcp.pop %v1846
        %v1848 = vmul.f32 %v1843, %v1847
        %s1849 = scalar_lea.vmem %s2, 80
        %v1850 = vld [vmem:[%s1849] sm:$0xff]
        %v1851 = vld [vmem:[%s1849 + $0x8] sm:$0x1f]
        %1852 = vrot.lane.b32.xlu0 %v511, 35
        %v1853 = vpop.permute.xlu0 %1852
        %v1854 = vsel %vm539, %v1853, 0
        %v1857 = vsel %vm633, %v1851, 0
        %1859 = vmatprep.subr.mxu0 0.0
        %1860 = vmatpush1.msra.mxu0 %v1850
        %1861 = vmatprep.subr.mxu0 0.0
        %1862 = vmatpush1.msra.mxu0 %v1857
        %1863 = vmatprep.subr.mxu0 0.0
        %1864 = vmatpush1.msra.mxu0 0.0
        %1865 = vmatprep.subr.mxu0 0.0
        %1866 = vmatpush1.msra.mxu0 0.0
        %1867 = vmatprep.subr.mxu0 0.0
        %1868 = vmatpush1.msra.mxu0 0.0
        %1869 = vmatprep.subr.mxu0 0.0
        %1870 = vmatpush1.msra.mxu0 0.0
        %1871 = vmatprep.subr.mxu0 0.0
        %1872 = vmatpush1.msra.mxu0 0.0
        %1873 = vmatprep.subr.mxu0 0.0
        %1874 = vmatpush1.msra.mxu0 0.0
        %1875 = vmatprep.subr.mxu0 0.0
        %1876 = vmatpush1.msra.mxu0 0.0
        %1877 = vmatprep.subr.mxu0 0.0
        %1878 = vmatpush1.msra.mxu0 0.0
        %1879 = vmatprep.subr.mxu0 0.0
        %1880 = vmatpush1.msra.mxu0 0.0
        %1881 = vmatprep.subr.mxu0 0.0
        %1882 = vmatpush1.msra.mxu0 0.0
        %1883 = vmatprep.subr.mxu0 0.0
        %1884 = vmatpush1.msra.mxu0 0.0
        %1885 = vmatprep.subr.mxu0 0.0
        %1886 = vmatpush1.msra.mxu0 0.0
        %1887 = vmatprep.subr.mxu0 0.0
        %1888 = vmatpush1.msra.mxu0 0.0
        %1889 = vmatprep.subr.mxu0 0.0
        %1890 = vmatpush1.msra.mxu0 0.0
        %1891 = vmatprep.subr.mxu0 0.0
        %1892 = vmatpush1.msra.mxu0 0.0
        %1893 = vmatprep.subr.mxu0 0.0
        %1894 = vmatpush1.msra.mxu0 0.0
        %1895 = vmatprep.subr.mxu0 0.0
        %1896 = vmatpush1.msra.mxu0 0.0
        %1897 = vmatprep.subr.mxu0 0.0
        %1898 = vmatpush1.msra.mxu0 0.0
        %1899 = vmatprep.subr.mxu0 0.0
        %1900 = vmatpush1.msra.mxu0 0.0
        %1901 = vmatprep.subr.mxu0 0.0
        %1902 = vmatpush1.msra.mxu0 0.0
        %1903 = vmatprep.subr.mxu0 0.0
        %1904 = vmatpush1.msra.mxu0 0.0
        %1905 = vmatprep.subr.mxu0 0.0
        %1906 = vmatpush1.msra.mxu0 0.0
        %1907 = vmatprep.subr.mxu0 0.0
        %1908 = vmatpush1.msra.mxu0 0.0
        %1909 = vmatprep.subr.mxu0 0.0
        %1910 = vmatpush1.msra.mxu0 0.0
        %1911 = vmatprep.subr.mxu0 0.0
        %1912 = vmatpush1.msra.mxu0 0.0
        %1913 = vmatprep.subr.mxu0 0.0
        %1914 = vmatpush1.msra.mxu0 0.0
        %1915 = vmatprep.subr.mxu0 0.0
        %1916 = vmatpush1.msra.mxu0 0.0
        %1917 = vmatprep.subr.mxu0 0.0
        %1918 = vmatpush1.msra.mxu0 0.0
        %1919 = vmatprep.subr.mxu0 0.0
        %1920 = vmatpush1.msra.mxu0 0.0
        %1921 = vmatprep.subr.mxu0 0.0
        %1922 = vmatpush1.msra.mxu0 0.0
        %1923 = vmatprep.mubr.f32.mxu0 0.0
        %1924 = vmatmul.mubr.f32.gmra.mrb[0].mxu0 %v1854
        %v1925 = vpop.f32.mrb[0].mxu0
        %v1926 = vadd.f32 0.0, %v1925
        %v1927 = vpop.f32.mrb[0].mxu0
        %1928 = vdwg.mxu0
        %v1930 = vsel %vm614, %v1848, 0
        %1932 = vmatprep.subr.mxu0 0.0
        %1933 = vmatpush1.msra.mxu0 %v1926
        %1934 = vmatprep.subr.mxu0 0.0
        %1935 = vmatpush1.msra.mxu0 0.0
        %1936 = vmatprep.subr.mxu0 0.0
        %1937 = vmatpush1.msra.mxu0 0.0
        %1938 = vmatprep.subr.mxu0 0.0
        %1939 = vmatpush1.msra.mxu0 0.0
        %1940 = vmatprep.subr.mxu0 0.0
        %1941 = vmatpush1.msra.mxu0 0.0
        %1942 = vmatprep.subr.mxu0 0.0
        %1943 = vmatpush1.msra.mxu0 0.0
        %1944 = vmatprep.subr.mxu0 0.0
        %1945 = vmatpush1.msra.mxu0 0.0
        %1946 = vmatprep.subr.mxu0 0.0
        %1947 = vmatpush1.msra.mxu0 0.0
        %1948 = vmatprep.subr.mxu0 0.0
        %1949 = vmatpush1.msra.mxu0 0.0
        %1950 = vmatprep.subr.mxu0 0.0
        %1951 = vmatpush1.msra.mxu0 0.0
        %1952 = vmatprep.subr.mxu0 0.0
        %1953 = vmatpush1.msra.mxu0 0.0
        %1954 = vmatprep.subr.mxu0 0.0
        %1955 = vmatpush1.msra.mxu0 0.0
        %1956 = vmatprep.subr.mxu0 0.0
        %1957 = vmatpush1.msra.mxu0 0.0
        %1958 = vmatprep.subr.mxu0 0.0
        %1959 = vmatpush1.msra.mxu0 0.0
        %1960 = vmatprep.subr.mxu0 0.0
        %1961 = vmatpush1.msra.mxu0 0.0
        %1962 = vmatprep.subr.mxu0 0.0
        %1963 = vmatpush1.msra.mxu0 0.0
        %1964 = vmatprep.subr.mxu0 0.0
        %1965 = vmatpush1.msra.mxu0 0.0
        %1966 = vmatprep.subr.mxu0 0.0
        %1967 = vmatpush1.msra.mxu0 0.0
        %1968 = vmatprep.subr.mxu0 0.0
        %1969 = vmatpush1.msra.mxu0 0.0
        %1970 = vmatprep.subr.mxu0 0.0
        %1971 = vmatpush1.msra.mxu0 0.0
        %1972 = vmatprep.subr.mxu0 0.0
        %1973 = vmatpush1.msra.mxu0 0.0
        %1974 = vmatprep.subr.mxu0 0.0
        %1975 = vmatpush1.msra.mxu0 0.0
        %1976 = vmatprep.subr.mxu0 0.0
        %1977 = vmatpush1.msra.mxu0 0.0
        %1978 = vmatprep.subr.mxu0 0.0
        %1979 = vmatpush1.msra.mxu0 0.0
        %1980 = vmatprep.subr.mxu0 0.0
        %1981 = vmatpush1.msra.mxu0 0.0
        %1982 = vmatprep.subr.mxu0 0.0
        %1983 = vmatpush1.msra.mxu0 0.0
        %1984 = vmatprep.subr.mxu0 0.0
        %1985 = vmatpush1.msra.mxu0 0.0
        %1986 = vmatprep.subr.mxu0 0.0
        %1987 = vmatpush1.msra.mxu0 0.0
        %1988 = vmatprep.subr.mxu0 0.0
        %1989 = vmatpush1.msra.mxu0 0.0
        %1990 = vmatprep.subr.mxu0 0.0
        %1991 = vmatpush1.msra.mxu0 0.0
        %1992 = vmatprep.subr.mxu0 0.0
        %1993 = vmatpush1.msra.mxu0 0.0
        %1994 = vmatprep.subr.mxu0 0.0
        %1995 = vmatpush1.msra.mxu0 0.0
        %1996 = vmatprep.mubr.f32.mxu0 0.0
        %1997 = vmatmul.mubr.f32.gmra.mrb[0].mxu0 %v1930
        %v1998 = vpop.f32.mrb[0].mxu0
        %v1999 = vadd.f32 0.0, %v1998
        %v2000 = vpop.f32.mrb[0].mxu0
        %2001 = vdwg.mxu0
        %v2002 = vadd.f32 %v1758, %v1999
        %v2003 = vadd.f32 %v1759, %v1926
        %2005 = vset.pattern.permute.xlu0 0
        %2006 = vperm.xlu0 %2005, %v535
        %v2007 = vpop.permute.xlu0 %2006
        %v2009 = vmul.f32 %v2003, %v2007
        %v2010 = vld [vmem:[%s375] sm:$0xff]
        %v2012 = vsel %vm614, %v2010, 0
        %2014 = vmatprep.subr.mxu0 0.0
        %2015 = vmatpush1.msra.mxu0 %v2009
        %2016 = vmatprep.subr.mxu0 0.0
        %2017 = vmatpush1.msra.mxu0 0.0
        %2018 = vmatprep.subr.mxu0 0.0
        %2019 = vmatpush1.msra.mxu0 0.0
        %2020 = vmatprep.subr.mxu0 0.0
        %2021 = vmatpush1.msra.mxu0 0.0
        %2022 = vmatprep.subr.mxu0 0.0
        %2023 = vmatpush1.msra.mxu0 0.0
        %2024 = vmatprep.subr.mxu0 0.0
        %2025 = vmatpush1.msra.mxu0 0.0
        %2026 = vmatprep.subr.mxu0 0.0
        %2027 = vmatpush1.msra.mxu0 0.0
        %2028 = vmatprep.subr.mxu0 0.0
        %2029 = vmatpush1.msra.mxu0 0.0
        %2030 = vmatprep.subr.mxu0 0.0
        %2031 = vmatpush1.msra.mxu0 0.0
        %2032 = vmatprep.subr.mxu0 0.0
        %2033 = vmatpush1.msra.mxu0 0.0
        %2034 = vmatprep.subr.mxu0 0.0
        %2035 = vmatpush1.msra.mxu0 0.0
        %2036 = vmatprep.subr.mxu0 0.0
        %2037 = vmatpush1.msra.mxu0 0.0
        %2038 = vmatprep.subr.mxu0 0.0
        %2039 = vmatpush1.msra.mxu0 0.0
        %2040 = vmatprep.subr.mxu0 0.0
        %2041 = vmatpush1.msra.mxu0 0.0
        %2042 = vmatprep.subr.mxu0 0.0
        %2043 = vmatpush1.msra.mxu0 0.0
        %2044 = vmatprep.subr.mxu0 0.0
        %2045 = vmatpush1.msra.mxu0 0.0
        %2046 = vmatprep.subr.mxu0 0.0
        %2047 = vmatpush1.msra.mxu0 0.0
        %2048 = vmatprep.subr.mxu0 0.0
        %2049 = vmatpush1.msra.mxu0 0.0
        %2050 = vmatprep.subr.mxu0 0.0
        %2051 = vmatpush1.msra.mxu0 0.0
        %2052 = vmatprep.subr.mxu0 0.0
        %2053 = vmatpush1.msra.mxu0 0.0
        %2054 = vmatprep.subr.mxu0 0.0
        %2055 = vmatpush1.msra.mxu0 0.0
        %2056 = vmatprep.subr.mxu0 0.0
        %2057 = vmatpush1.msra.mxu0 0.0
        %2058 = vmatprep.subr.mxu0 0.0
        %2059 = vmatpush1.msra.mxu0 0.0
        %2060 = vmatprep.subr.mxu0 0.0
        %2061 = vmatpush1.msra.mxu0 0.0
        %2062 = vmatprep.subr.mxu0 0.0
        %2063 = vmatpush1.msra.mxu0 0.0
        %2064 = vmatprep.subr.mxu0 0.0
        %2065 = vmatpush1.msra.mxu0 0.0
        %2066 = vmatprep.subr.mxu0 0.0
        %2067 = vmatpush1.msra.mxu0 0.0
        %2068 = vmatprep.subr.mxu0 0.0
        %2069 = vmatpush1.msra.mxu0 0.0
        %2070 = vmatprep.subr.mxu0 0.0
        %2071 = vmatpush1.msra.mxu0 0.0
        %2072 = vmatprep.subr.mxu0 0.0
        %2073 = vmatpush1.msra.mxu0 0.0
        %2074 = vmatprep.subr.mxu0 0.0
        %2075 = vmatpush1.msra.mxu0 0.0
        %2076 = vmatprep.subr.mxu0 0.0
        %2077 = vmatpush1.msra.mxu0 0.0
        %2078 = vmatprep.mubr.f32.mxu0 0.0
        %2079 = vmatmul.mubr.f32.gmra.mrb[0].mxu0 %v2012
        %v2080 = vpop.f32.mrb[0].mxu0
        %v2081 = vadd.f32 0.0, %v2080
        %v2082 = vpop.f32.mrb[0].mxu0
        %2083 = vdwg.mxu0
        %v2084 = vmul.f32 %v535, 0.5
        %2086 = vset.pattern.permute.xlu0 0
        %2087 = vperm.xlu0 %2086, %v2084
        %v2088 = vpop.permute.xlu0 %2087
        %v2090 = vmul.f32 %v2088, %v2081
        %v2091 = vadd.f32 %v2002, %v2090
        %v2092 = vld [vmem:[%s3] sm:$0x1]
        %v2094 = vlaneseq
        %v2095 = vshrl.u32 %v2094, 7
        %v2096 = vsub.s32 0, %v2095
        %v2097 = vrot.slane %v2092, %v2096
        %v2099 = vadd.f32 %v2091, %v2097
        %2100 = vst [vmem:[%s360] sm:$0xff] %v2099
        %s2101 = sand.u32 %s240, 1
        %s2102 = scalar_lea.sflag [#allocation3], %s2101
        %s2103 = sand.u32 %s240, 1
        %s2104 = smul.addr %s2103, 8
        %s2105 = scalar_lea.vmem [#allocation2], %s2104
        // Predicated region
        $region57: #{tpu_custom_call.1} parent=55 // pred_check
          %p2106 = pneg %p250
        $region58: #{tpu_custom_call.1} parent=55 // pred_check_branch
          %2108 = sbr.rel (%p2106) target = $region60
        $region59: #{tpu_custom_call.1} parent=55 // pred_region
          %s2110 = ssub.s32 128, 128
          %2111 = vsyncadd %s2102, %s2110
          %s2112 = smul.addr %s23, 128
          %s2113 = scalar_lea.hbm %s9, %s2112
          %s2115 = sshll.u32 %s2105, 4
          %s2116 = int_to_ptr.vmem [resolvable:$true] %s2115
          %2118 = dma.vmem_to_hbm [thread:$0]  %s2116, 128, %s2113, %s2102
        $region60: #{tpu_custom_call.1} parent=55 // pred_fallthru
          _
      $region56: #{tpu_custom_call.1} parent=5 // pred_fallthru
        _
      %p2119 = scmp.le.s32.totalorder 2, %s18
      // Predicated region
      $region61: #{tpu_custom_call.1} parent=5 // pred_check
        %p2120 = pneg %p2119
      $region62: #{tpu_custom_call.1} parent=5 // pred_check_branch
        %2122 = sbr.rel (%p2120) target = $region64
      $region63: #{tpu_custom_call.1} parent=5 // pred_region
        %s2123 = ssub.s32 %s18, 2
        // Predicated region
        $region65: #{tpu_custom_call.1} parent=63 // pred_check
          %p2124 = pneg %p256
        $region66: #{tpu_custom_call.1} parent=63 // pred_check_branch
          %2126 = sbr.rel (%p2124) target = $region68
        $region67: #{tpu_custom_call.1} parent=63 // pred_region
          %s2127 = sand.u32 %s241, 1
          %s2128 = scalar_lea.sflag [#allocation3], %s2127
          %s2129 = sand.u32 %s241, 1
          %s2130 = smul.addr %s2129, 8
          %s2131 = scalar_lea.vmem [#allocation2], %s2130
          %2132 = dma.done %s2128, 128
        $region68: #{tpu_custom_call.1} parent=63 // pred_fallthru
          _
      $region64: #{tpu_custom_call.1} parent=5 // pred_fallthru
        _
    $region6: #{tpu_custom_call.1} parent=1 // loop_footer
      %s22 = sadd.s32 1, %s18
    $region7: #{tpu_custom_call.1} parent=1 // loop_footer_branch
      %17 = sbr.rel target = $region3
    $region8: #{tpu_custom_call.1} parent=1 // loop_exit
      _
    %2133 = vsyncpa [#allocation3], 1
    %s2134 = scalar_lea.sflag [#allocation3], 1
    %2135 = vsyncpa %s2134, 1

</llo_original>
